<compile_context>
chip_gen: v5e
topology: v5e:2x2
jax: 0.10.0
libtpu: 0.0.40
codegen_flags: <defaults>
</compile_context>

<pallas_src>
import jax
import jax.numpy as jnp
from jax.experimental import pallas as pl
from jax.experimental.pallas import tpu as pltpu


def ffattention_kernel(x_ref, w_ref, b_ref, o_ref):
    # x_ref: (TB, L, D)   w_ref: (1, 1, D)   b_ref: (B, 1) resident   o_ref: (TB, 1, D)
    tb = x_ref.shape[0]
    d = x_ref.shape[2]
    x = x_ref[...]                                            # native dtype, no f32 copy

    # em[b, 0, l] = sum_d w[d] * x[b, l, d]    -- batched MXU dot, f32 accumulation.
    w3 = jnp.broadcast_to(w_ref[...].astype(x.dtype), (tb, 1, d))
    em = jnp.einsum("bqd,bld->bql", w3, x, preferred_element_type=jnp.float32)

    # Exact PyTorch (B, L) + (L, 1) broadcast: bias indexed by the *batch* row.
    # The full bias column is VMEM-resident; slice this tile's rows with pl.ds.
    start = pl.multiple_of(pl.program_id(0) * tb, tb)
    bias = b_ref[pl.ds(start, tb), :].astype(jnp.float32)     # (TB, 1)
    em = jnp.tanh(em + bias[:, :, None])                      # (TB, 1, L)

    alpha = jnp.exp(em)                                       # (TB, 1, L), f32
    denom = jnp.sum(alpha, axis=-1, keepdims=True) + 1e-7     # (TB, 1, 1)
    alpha = alpha * pl.reciprocal(denom, approx=True)         # EUP slot, ~free

    # out[b, 0, d] = sum_l alpha[b, 0, l] * x[b, l, d]  -- batched MXU dot, f32 acc.
    out = jnp.einsum("bql,bld->bqd", alpha.astype(x.dtype), x,
                     preferred_element_type=jnp.float32)      # (TB, 1, D)
    o_ref[...] = out.astype(o_ref.dtype)


def _vmem_capacity_bytes():
    """Generation-aware VMEM capacity (128 MiB v5e/v6e, 64 MiB/TC v7x)."""
    try:
        cap = int(getattr(pltpu.get_tpu_info(), "vmem_capacity_bytes", 0))
        if cap > 0:
            return cap
    except Exception:
        pass
    return 64 * 1024 * 1024   # conservative fallback (v7x per-TensorCore VMEM)


def _pick_tile_b(B, L, D, in_itemsize, out_itemsize, vmem_budget_bytes):
    """Largest batch tile whose double-buffered blocks plus f32 temporaries fit the
    budget, respecting the output dtype's sublane packing and preferring >=4 grid
    steps so v7x's two TensorCores each keep >=2 pipelined steps."""
    per_row = (2 * L * D * in_itemsize            # x block, double-buffered
               + 2 * 8 * D * out_itemsize         # (TB,1,D) out block, sublane-padded, x2
               + 8 * 4 * (2 * D + 2 * L))         # f32 rank-3 temps (w3, em, alpha, out)
    cap_rows = max(1, vmem_budget_bytes // max(per_row, 1))
    min_tile = max(8, 32 // max(out_itemsize, 1))  # 8 f32 / 16 bf16 / 32 int8 packs
    cands = sorted((t for t in range(min_tile, B + 1, min_tile) if B % t == 0),
                   reverse=True)
    if not cands:
        cands = sorted((t for t in range(1, B + 1) if B % t == 0), reverse=True)
    for min_steps in (4, 2, 1):
        for t in cands:
            if t <= cap_rows and B // t >= min_steps:
                return t
    return cands[-1]


def ffattention_forward(x_emb, w, bias, *, tile_b=None):
    """x_emb: (B, L, D); w: (D, 1); bias: (L, 1)  ->  (B, D)."""
    B, L, D = x_emb.shape
    # The module's `em += bias` broadcast ((B,L)+(L,1)) only works when B == L.
    assert B == L, "FFAttention's bias broadcast requires batch == input_len"

    w_row = w.reshape(1, 1, D).astype(jnp.float32)     # lane-dense, VMEM-resident
    bias_col = bias.reshape(B, 1).astype(jnp.float32)  # full column, VMEM-resident

    vmem_cap = _vmem_capacity_bytes()
    if tile_b is None:
        tile_b = _pick_tile_b(B, L, D,
                              x_emb.dtype.itemsize, x_emb.dtype.itemsize,
                              vmem_budget_bytes=int(vmem_cap * 0.55))
    assert B % tile_b == 0, "tile_b must divide the batch dimension"
    grid = (B // tile_b,)

    out3 = pl.pallas_call(
        ffattention_kernel,
        out_shape=jax.ShapeDtypeStruct((B, 1, D), x_emb.dtype),
        grid=grid,
        in_specs=[
            pl.BlockSpec((tile_b, L, D), lambda i: (i, 0, 0)),   # x tile (pipelined)
            pl.BlockSpec((1, 1, D), lambda i: (0, 0, 0)),        # w row  (resident)
            pl.BlockSpec((B, 1), lambda i: (0, 0)),              # full bias (resident)
        ],
        out_specs=pl.BlockSpec((tile_b, 1, D), lambda i: (i, 0, 0)),  # lane-dense
        compiler_params=pltpu.CompilerParams(
            dimension_semantics=("parallel",),        # v7x: shard batch across both TCs
            vmem_limit_bytes=int(vmem_cap * 0.85),    # explicit, generation-aware limit
        ),
    )(x_emb, w_row, bias_col)
    return out3.reshape(B, D)   # free XLA reshape outside the kernel


if __name__ == "__main__":
    # Small shapes consistent with the module (defaults 128/128/640):
    # B == L required by the module's bias broadcast; D multiple of 128 -> lane-dense.
    B = L = 16
    D = 640

    key = jax.random.PRNGKey(0)
    kx, kw, kb = jax.random.split(key, 3)
    x = jax.random.normal(kx, (B, L, D), jnp.float32)
    # xavier_uniform_ on (D, 1): U(-a, a) with a = sqrt(6 / (D + 1))
    a = (6.0 / (D + 1)) ** 0.5
    w = jax.random.uniform(kw, (D, 1), jnp.float32, -a, a)
    # The module zero-inits the bias; use small random values to exercise the path.
    bias = 0.1 * jax.random.normal(kb, (L, 1), jnp.float32)

    y = ffattention_forward(x, w, bias)   # picker chooses tile_b=8 -> grid=(2,)
    jax.block_until_ready(y)

    # Pure-JAX reference mirroring the torch forward (incl. the (B,L)+(L,1) broadcast).
    em_ref = (x.reshape(-1, D) @ w).reshape(B, L)
    em_ref = em_ref + bias                                   # (B, L) + (L, 1)
    em_ref = jnp.tanh(em_ref)
    alpha_ref = jnp.exp(em_ref)
    alpha_ref = alpha_ref / (jnp.sum(alpha_ref, axis=1, keepdims=True) + 1e-7)
    y_ref = jnp.sum(x * alpha_ref[:, :, None], axis=1)

    assert y.shape == (B, D)
    # Tolerance covers the EUP approximate reciprocal (~1e-3 rel) and MXU f32 passes.
    assert jnp.allclose(y, y_ref, atol=5e-3, rtol=5e-3), "mismatch vs reference"
    print("KERNEL_OK")
</pallas_src>

<mosaic_0001>
module attributes {stable_mosaic.version = 11 : i64} {
  func.func @ffattention_kernel(%arg0: i32, %arg1: memref<8x16x640xf32, #tpu.memory_space<vmem>>, %arg2: memref<1x1x640xf32, #tpu.memory_space<vmem>>, %arg3: memref<16x1xf32, #tpu.memory_space<vmem>>, %arg4: memref<8x1x640xf32, #tpu.memory_space<vmem>>) attributes {dimension_semantics = [#tpu.dimension_semantics<parallel>], iteration_bounds = array<i64: 2>, scalar_prefetch = 0 : i64, scratch_operands = 0 : i64, tpu.core_type = #tpu.core_type<tc>, window_params = [{transform_indices = @transform_0, window_bounds = array<i64: 8, 16, 640>}, {pipeline_mode = #tpu.pipeline_mode<synchronous>, transform_indices = @transform_1, window_bounds = array<i64: 1, 1, 640>}, {pipeline_mode = #tpu.pipeline_mode<synchronous>, transform_indices = @transform_2, window_bounds = array<i64: 16, 1>}, {transform_indices = @transform_3, window_bounds = array<i64: 8, 1, 640>}]} {
    %c0 = arith.constant 0 : index
    %c0_0 = arith.constant 0 : index
    %c0_1 = arith.constant 0 : index
    %0 = vector.load %arg1[%c0, %c0_0, %c0_1] : memref<8x16x640xf32, #tpu.memory_space<vmem>>, vector<8x16x640xf32>
    %c0_2 = arith.constant 0 : index
    %c0_3 = arith.constant 0 : index
    %c0_4 = arith.constant 0 : index
    %1 = vector.load %arg2[%c0_2, %c0_3, %c0_4] : memref<1x1x640xf32, #tpu.memory_space<vmem>>, vector<1x1x640xf32>
    %2 = vector.shape_cast %1 : vector<1x1x640xf32> to vector<1x1x640xf32>
    %3 = vector.broadcast %2 : vector<1x1x640xf32> to vector<8x1x640xf32>
    "tpu.trace_start"() <{level = 10 : i32, message = "bqd,bld->bql"}> : () -> ()
    %cst = arith.constant dense<0.000000e+00> : vector<8x1x16xf32>
    %4 = tpu.matmul %3, %0, %cst {dimension_numbers = #tpu.dot_dimension_numbers<[2], [2], [1], [1], [0, 0, 0, 1, 1, 1], [0], [0]>} : vector<8x1x640xf32>, vector<8x16x640xf32>, vector<8x1x16xf32> -> vector<8x1x16xf32>
    "tpu.trace_stop"() : () -> ()
    %c8_i32 = arith.constant 8 : i32
    %5 = arith.muli %arg0, %c8_i32 : i32
    %6 = tpu.assume_multiple %5, 8 : i32
    %7 = arith.index_cast %6 : i32 to index
    %c0_5 = arith.constant 0 : index
    %8 = vector.load %arg3[%7, %c0_5] : memref<16x1xf32, #tpu.memory_space<vmem>>, vector<8x1xf32>
    %9 = vector.shape_cast %8 : vector<8x1xf32> to vector<8x1x1xf32>
    %10 = vector.broadcast %9 : vector<8x1x1xf32> to vector<8x1x16xf32>
    %11 = arith.addf %4, %10 : vector<8x1x16xf32>
    %12 = math.tanh %11 : vector<8x1x16xf32>
    %13 = math.exp %12 : vector<8x1x16xf32>
    %cst_6 = arith.constant dense<0.000000e+00> : vector<8x1xf32>
    %14 = vector.multi_reduction <add>, %13, %cst_6 [2] : vector<8x1x16xf32> to vector<8x1xf32>
    %15 = vector.shape_cast %14 : vector<8x1xf32> to vector<8x1x1xf32>
    %cst_7 = arith.constant 1.000000e-07 : f32
    %16 = vector.broadcast %cst_7 : f32 to vector<8x1x1xf32>
    %17 = arith.addf %15, %16 : vector<8x1x1xf32>
    %18 = tpu.reciprocal %17 {approx = true} : vector<8x1x1xf32> -> vector<8x1x1xf32>
    %19 = vector.broadcast %18 : vector<8x1x1xf32> to vector<8x1x16xf32>
    %20 = arith.mulf %13, %19 : vector<8x1x16xf32>
    "tpu.trace_start"() <{level = 10 : i32, message = "bql,bld->bqd"}> : () -> ()
    %cst_8 = arith.constant dense<0.000000e+00> : vector<8x1x640xf32>
    %21 = tpu.matmul %20, %0, %cst_8 {dimension_numbers = #tpu.dot_dimension_numbers<[2], [1], [1], [2], [0, 0, 0, 1, 1, 2], [0], [0]>} : vector<8x1x16xf32>, vector<8x16x640xf32>, vector<8x1x640xf32> -> vector<8x1x640xf32>
    "tpu.trace_stop"() : () -> ()
    %c0_9 = arith.constant 0 : index
    %c0_10 = arith.constant 0 : index
    %c0_11 = arith.constant 0 : index
    %22 = vector.load %arg4[%c0_9, %c0_10, %c0_11] : memref<8x1x640xf32, #tpu.memory_space<vmem>>, vector<8x1x640xf32>
    tpu.vector_store %arg4[%c0_9, %c0_10, %c0_11], %21 {strides = array<i32>} : memref<8x1x640xf32, #tpu.memory_space<vmem>>, vector<8x1x640xf32>,
    return
  }
  func.func @transform_0(%arg0: i32) -> (i32, i32, i32) {
    %c0_i32 = arith.constant 0 : i32
    %c0_i32_0 = arith.constant 0 : i32
    %c0_i32_1 = arith.constant 0 : i32
    return %arg0, %c0_i32, %c0_i32_0 : i32, i32, i32
  }
  func.func @transform_1(%arg0: i32) -> (i32, i32, i32) {
    %c0_i32 = arith.constant 0 : i32
    %c0_i32_0 = arith.constant 0 : i32
    %c0_i32_1 = arith.constant 0 : i32
    %c0_i32_2 = arith.constant 0 : i32
    return %c0_i32, %c0_i32_0, %c0_i32_1 : i32, i32, i32
  }
  func.func @transform_2(%arg0: i32) -> (i32, i32) {
    %c0_i32 = arith.constant 0 : i32
    %c0_i32_0 = arith.constant 0 : i32
    %c0_i32_1 = arith.constant 0 : i32
    return %c0_i32, %c0_i32_0 : i32, i32
  }
  func.func @transform_3(%arg0: i32) -> (i32, i32, i32) {
    %c0_i32 = arith.constant 0 : i32
    %c0_i32_0 = arith.constant 0 : i32
    %c0_i32_1 = arith.constant 0 : i32
    return %arg0, %c0_i32, %c0_i32_0 : i32, i32, i32
  }
}

</mosaic_0001>

<llo_original>
// kernel: tpu_custom_call.1
$region0: #{tpu_custom_call.1}
  #allocation0 [shape = 'u32[]', space=smem, size = 0x4, offset = 0x4, fixed_abs, tag = 'smem constant byte address 0x4 - core index']
  #allocation1 [shape = 'u32[72,128]{1,0:T(1,128)}', space=vmem, size = 0x9000, scoped, tag = 'internal scratch']
  %s0 = inlined_call_operand.hbm [shape: f32[16,16,640], index: 0, kind: input, shape index: {}]
  %s1 = inlined_call_operand.vmem [shape: f32[1,1,640], index: 1, kind: input, shape index: {}]
  %s2 = inlined_call_operand.vmem [shape: f32[16,1], index: 2, kind: input, shape index: {}]
  %s3 = inlined_call_operand.hbm [shape: f32[16,1,640], index: 3, kind: output, shape index: {}]
  %s4 = sld [smem:[#allocation0]]
  $region49: #{tpu_custom_call.1} parent=0
    _
  %s6 = ssub.s32 1, %s4
  %s7 = scalar_select 0, %s6, %s4
  $region1: #{tpu_custom_call.1} parent=0
    #allocation2 [shape = 'u8[655360]{0}', space=vmem, size = 0xa0000, scoped, tag = 'input window, operand 0']
    #allocation3 [shape = 's32[2]{0}', space=sflag, size = 0x8, scoped, tag = 'scoped memory for tpu_custom_call.1']
    #allocation4 [shape = 's32[2]{0}', space=sflag, size = 0x8, scoped, tag = 'scoped memory for tpu_custom_call.1']
    #allocation5 [shape = 'u8[40960]{0}', space=vmem, size = 0xa000, scoped, tag = 'output window, operand 0']
    %8 = vsyncpa [#allocation3], 0
    %s9 = scalar_lea.sflag [#allocation3], 1
    %10 = vsyncpa %s9, 0
    %11 = vsyncpa [#allocation4], 0
    %s12 = scalar_lea.sflag [#allocation4], 1
    %13 = vsyncpa %s12, 0
    loop: start=0, step=1, limit=4
    $region2: #{tpu_custom_call.1} parent=1 // loop_pre_header
      _
    $region3: #{tpu_custom_call.1} parent=1 // loop_header
      %s15 = sphi 0, %s19
      %p16 = scmp.ge.s32.totalorder %s15, 4
      %s25 = sphi 0, %s27
      %s28 = sphi 0, %s25
      %s29 = sphi 0, %s28
      %s45 = sphi 0, %s29
      %s49 = sphi 0, %s49
      %s51 = sphi 0, %s49
      %s52 = sphi 0, %s51
      %s66 = sphi 0, %s52
      %s70 = sphi 0, %s70
      %s72 = sphi 0, %s70
      %s73 = sphi 0, %s72
      %s87 = sphi 0, %s73
      %s93 = sphi 0, %s95
      %s96 = sphi 0, %s93
      %s97 = sphi 0, %s96
      %s113 = sphi 0, %s97
    $region4: #{tpu_custom_call.1} parent=1 // loop_header_branch
      %18 = sbr.rel (%p16) target = $region8
    $region5: #{tpu_custom_call.1} parent=1 // loop_body
      %s20 = ssub.s32 %s15, 1
      %s21 = ssub.s32 %s15, 2
      %s22 = sadd.s32 %s15, 1
      %s23 = ssub.s32 %s15, %s22
      %p24 = scmp.eq.s32.totalorder %s23, 0
      %s26 = sadd.s32 %s25, 1
      %s27 = scalar_select %p24, %s25, %s26
      %p30 = pneg %p24
      %p31 = scmp.eq.s32.totalorder %s15, 1
      %p32 = por %p30, %p31
      %p33 = scmp.ne.s32.totalorder %s25, %s28
      %p34 = scmp.eq.s32.totalorder %s15, 0
      %p35 = por %p33, %p34
      %p36 = scmp.ne.s32.totalorder %s25, %s28
      %p37 = scmp.eq.s32.totalorder %s20, 1
      %p38 = por %p36, %p37
      %p39 = scmp.ne.s32.totalorder %s28, %s29
      %p40 = scmp.eq.s32.totalorder %s20, 0
      %p41 = por %p39, %p40
      %p42 = scmp.ne.s32.totalorder %s28, %s29
      %p43 = scmp.eq.s32.totalorder %s21, 1
      %p44 = por %p42, %p43
      %p46 = scmp.ne.s32.totalorder %s29, %s45
      %p47 = scmp.eq.s32.totalorder %s21, 0
      %p48 = por %p46, %p47
      %s50 = sadd.s32 %s49, 1
      %p53 = scmp.eq.s32.totalorder %s15, 1
      %p54 = scmp.ne.s32.totalorder %s49, %s51
      %p55 = scmp.eq.s32.totalorder %s15, 0
      %p56 = por %p54, %p55
      %p57 = scmp.ne.s32.totalorder %s49, %s51
      %p58 = scmp.eq.s32.totalorder %s20, 1
      %p59 = por %p57, %p58
      %p60 = scmp.ne.s32.totalorder %s51, %s52
      %p61 = scmp.eq.s32.totalorder %s20, 0
      %p62 = por %p60, %p61
      %p63 = scmp.ne.s32.totalorder %s51, %s52
      %p64 = scmp.eq.s32.totalorder %s21, 1
      %p65 = por %p63, %p64
      %p67 = scmp.ne.s32.totalorder %s52, %s66
      %p68 = scmp.eq.s32.totalorder %s21, 0
      %p69 = por %p67, %p68
      %s71 = sadd.s32 %s70, 1
      %p74 = scmp.eq.s32.totalorder %s15, 1
      %p75 = scmp.ne.s32.totalorder %s70, %s72
      %p76 = scmp.eq.s32.totalorder %s15, 0
      %p77 = por %p75, %p76
      %p78 = scmp.ne.s32.totalorder %s70, %s72
      %p79 = scmp.eq.s32.totalorder %s20, 1
      %p80 = por %p78, %p79
      %p81 = scmp.ne.s32.totalorder %s72, %s73
      %p82 = scmp.eq.s32.totalorder %s20, 0
      %p83 = por %p81, %p82
      %p84 = scmp.ne.s32.totalorder %s72, %s73
      %p85 = scmp.eq.s32.totalorder %s21, 1
      %p86 = por %p84, %p85
      %p88 = scmp.ne.s32.totalorder %s73, %s87
      %p89 = scmp.eq.s32.totalorder %s21, 0
      %p90 = por %p88, %p89
      %s91 = ssub.s32 %s15, %s22
      %p92 = scmp.eq.s32.totalorder %s91, 0
      %s94 = sadd.s32 %s93, 1
      %s95 = scalar_select %p92, %s93, %s94
      %p98 = pneg %p92
      %p99 = scmp.eq.s32.totalorder %s15, 1
      %p100 = por %p98, %p99
      %p101 = scmp.ne.s32.totalorder %s93, %s96
      %p102 = scmp.eq.s32.totalorder %s15, 0
      %p103 = por %p101, %p102
      %p104 = scmp.ne.s32.totalorder %s93, %s96
      %p105 = scmp.eq.s32.totalorder %s20, 1
      %p106 = por %p104, %p105
      %p107 = scmp.ne.s32.totalorder %s96, %s97
      %p108 = scmp.eq.s32.totalorder %s20, 0
      %p109 = por %p107, %p108
      %p110 = scmp.ne.s32.totalorder %s96, %s97
      %p111 = scmp.eq.s32.totalorder %s21, 1
      %p112 = por %p110, %p111
      %p114 = scmp.ne.s32.totalorder %s97, %s113
      %p115 = scmp.eq.s32.totalorder %s21, 0
      %p116 = por %p114, %p115
      %p117 = scmp.le.s32.totalorder 1, %s15
      %p118 = scmp.lt.s32.totalorder %s15, 3
      %p119 = pnand %p117, %p118
      %p120 = pneg %p119
      // Predicated region
      $region9: #{tpu_custom_call.1} parent=5 // pred_check
        _
      $region10: #{tpu_custom_call.1} parent=5 // pred_check_branch
        %122 = sbr.rel (%p119) target = $region12
      $region11: #{tpu_custom_call.1} parent=5 // pred_region
        %s123 = ssub.s32 %s15, 1
        // Predicated region
        $region13: #{tpu_custom_call.1} parent=11 // pred_check
          %p124 = pneg %p62
        $region14: #{tpu_custom_call.1} parent=11 // pred_check_branch
          %126 = sbr.rel (%p124) target = $region16
        $region15: #{tpu_custom_call.1} parent=11 // pred_region
          _
        $region16: #{tpu_custom_call.1} parent=11 // pred_fallthru
          _
        // Predicated region
        $region17: #{tpu_custom_call.1} parent=11 // pred_check
          %p127 = pneg %p83
        $region18: #{tpu_custom_call.1} parent=11 // pred_check_branch
          %129 = sbr.rel (%p127) target = $region20
        $region19: #{tpu_custom_call.1} parent=11 // pred_region
          _
        $region20: #{tpu_custom_call.1} parent=11 // pred_fallthru
          _
      $region12: #{tpu_custom_call.1} parent=5 // pred_fallthru
        _
      %p130 = scmp.lt.s32.totalorder %s15, 2
      // Predicated region
      $region21: #{tpu_custom_call.1} parent=5 // pred_check
        %p131 = pneg %p130
      $region22: #{tpu_custom_call.1} parent=5 // pred_check_branch
        %133 = sbr.rel (%p131) target = $region24
      $region23: #{tpu_custom_call.1} parent=5 // pred_region
        // Predicated region
        $region25: #{tpu_custom_call.1} parent=23 // pred_check
          %p134 = pneg %p35
        $region26: #{tpu_custom_call.1} parent=23 // pred_check_branch
          %136 = sbr.rel (%p134) target = $region28
        $region27: #{tpu_custom_call.1} parent=23 // pred_region
          %s137 = sand.u32 %s25, 1
          %s138 = scalar_lea.sflag [#allocation3], %s137
          %s139 = sand.u32 %s25, 1
          %s140 = smul.addr %s139, 640
          %s141 = scalar_lea.vmem [#allocation2], %s140
          %s142 = smul.u32 8, %s15
          %144 = vsyncadd %s138, 0
          %s145 = smul.addr %s142, 10
          %s146 = smul.addr %s145, 8
          %s147 = scalar_lea.hbm %s0, %s146
          %s148 = sshll.u32 %s147, 4
          %s149 = int_to_ptr.hbm [resolvable:$true] %s148
          %s150 = sshll.u32 %s141, 4
          %s151 = int_to_ptr.vmem [resolvable:$true] %s150
          %156 = dma.hbm_to_vmem [thread:$0]  %s149, 10240, %s151, %s138, 640, 640, 40
        $region28: #{tpu_custom_call.1} parent=23 // pred_fallthru
          _
      $region24: #{tpu_custom_call.1} parent=5 // pred_fallthru
        _
      %p157 = scmp.le.s32.totalorder 1, %s15
      %p158 = scmp.lt.s32.totalorder %s15, 3
      %p159 = pnand %p157, %p158
      %p160 = pneg %p159
      // Predicated region
      $region29: #{tpu_custom_call.1} parent=5 // pred_check
        _
      $region30: #{tpu_custom_call.1} parent=5 // pred_check_branch
        %162 = sbr.rel (%p159) target = $region32
      $region31: #{tpu_custom_call.1} parent=5 // pred_region
        %s163 = ssub.s32 %s15, 1
        %s164 = sand.u32 %s28, 1
        %s165 = scalar_lea.sflag [#allocation3], %s164
        %s166 = sand.u32 %s28, 1
        %s167 = smul.addr %s166, 640
        %s168 = scalar_lea.vmem [#allocation2], %s167
        // Predicated region
        $region33: #{tpu_custom_call.1} parent=31 // pred_check
          %p169 = pneg %p41
        $region34: #{tpu_custom_call.1} parent=31 // pred_check_branch
          %171 = sbr.rel (%p169) target = $region36
        $region35: #{tpu_custom_call.1} parent=31 // pred_region
          %173 = dma.done %s165, 10240
        $region36: #{tpu_custom_call.1} parent=31 // pred_fallthru
          _
        %s174 = sand.u32 %s28, 1
        %s175 = scalar_lea.sflag [#allocation3], %s174
        %s176 = sand.u32 %s28, 1
        %s177 = smul.addr %s176, 640
        %s178 = scalar_lea.vmem [#allocation2], %s177
        %p179 = pneg %p41
        %p180 = pneg %p38
        %p181 = pneg %p62
        %p182 = pneg %p59
        %p183 = pneg %p83
        %p184 = pneg %p80
        %p185 = pneg %p109
        %p186 = pneg %p106
        %s187 = sand.u32 %s96, 1
        %s188 = scalar_lea.sflag [#allocation4], %s187
        %s189 = sand.u32 %s96, 1
        %s190 = smul.addr %s189, 40
        %s191 = scalar_lea.vmem [#allocation5], %s190
        %s192 = smul.u32 8, %s20
        %s193 = smul.u32 8, %s20
        %v194 = vld [vmem:[%s168] sm:$0xff]
        %v195 = vld [vmem:[%s168 + $0x8] sm:$0xff]
        %v196 = vld [vmem:[%s168 + $0x10] sm:$0xff]
        %v197 = vld [vmem:[%s168 + $0x18] sm:$0xff]
        %v198 = vld [vmem:[%s168 + $0x20] sm:$0xff]
        %v199 = vld [vmem:[%s168 + $0x28] sm:$0xff]
        %v200 = vld [vmem:[%s168 + $0x30] sm:$0xff]
        %v201 = vld [vmem:[%s168 + $0x38] sm:$0xff]
        %v202 = vld [vmem:[%s168 + $0x40] sm:$0xff]
        %v203 = vld [vmem:[%s168 + $0x48] sm:$0xff]
        %v204 = vld [vmem:[%s168 + $0x50] sm:$0xff]
        %v205 = vld [vmem:[%s168 + $0x58] sm:$0xff]
        %v206 = vld [vmem:[%s168 + $0x60] sm:$0xff]
        %v207 = vld [vmem:[%s168 + $0x68] sm:$0xff]
        %v208 = vld [vmem:[%s168 + $0x70] sm:$0xff]
        %v209 = vld [vmem:[%s168 + $0x78] sm:$0xff]
        %v210 = vld [vmem:[%s168 + $0x80] sm:$0xff]
        %v211 = vld [vmem:[%s168 + $0x88] sm:$0xff]
        %v212 = vld [vmem:[%s168 + $0x90] sm:$0xff]
        %v213 = vld [vmem:[%s168 + $0x98] sm:$0xff]
        %v214 = vld [vmem:[%s168 + $0xa0] sm:$0xff]
        %v215 = vld [vmem:[%s168 + $0xa8] sm:$0xff]
        %v216 = vld [vmem:[%s168 + $0xb0] sm:$0xff]
        %v217 = vld [vmem:[%s168 + $0xb8] sm:$0xff]
        %v218 = vld [vmem:[%s168 + $0xc0] sm:$0xff]
        %v219 = vld [vmem:[%s168 + $0xc8] sm:$0xff]
        %v220 = vld [vmem:[%s168 + $0xd0] sm:$0xff]
        %v221 = vld [vmem:[%s168 + $0xd8] sm:$0xff]
        %v222 = vld [vmem:[%s168 + $0xe0] sm:$0xff]
        %v223 = vld [vmem:[%s168 + $0xe8] sm:$0xff]
        %v224 = vld [vmem:[%s168 + $0xf0] sm:$0xff]
        %v225 = vld [vmem:[%s168 + $0xf8] sm:$0xff]
        %v226 = vld [vmem:[%s168 + $0x100] sm:$0xff]
        %v227 = vld [vmem:[%s168 + $0x108] sm:$0xff]
        %v228 = vld [vmem:[%s168 + $0x110] sm:$0xff]
        %v229 = vld [vmem:[%s168 + $0x118] sm:$0xff]
        %v230 = vld [vmem:[%s168 + $0x120] sm:$0xff]
        %v231 = vld [vmem:[%s168 + $0x128] sm:$0xff]
        %v232 = vld [vmem:[%s168 + $0x130] sm:$0xff]
        %v233 = vld [vmem:[%s168 + $0x138] sm:$0xff]
        %v234 = vld [vmem:[%s168 + $0x140] sm:$0xff]
        %v235 = vld [vmem:[%s168 + $0x148] sm:$0xff]
        %v236 = vld [vmem:[%s168 + $0x150] sm:$0xff]
        %v237 = vld [vmem:[%s168 + $0x158] sm:$0xff]
        %v238 = vld [vmem:[%s168 + $0x160] sm:$0xff]
        %v239 = vld [vmem:[%s168 + $0x168] sm:$0xff]
        %v240 = vld [vmem:[%s168 + $0x170] sm:$0xff]
        %v241 = vld [vmem:[%s168 + $0x178] sm:$0xff]
        %v242 = vld [vmem:[%s168 + $0x180] sm:$0xff]
        %v243 = vld [vmem:[%s168 + $0x188] sm:$0xff]
        %v244 = vld [vmem:[%s168 + $0x190] sm:$0xff]
        %v245 = vld [vmem:[%s168 + $0x198] sm:$0xff]
        %v246 = vld [vmem:[%s168 + $0x1a0] sm:$0xff]
        %v247 = vld [vmem:[%s168 + $0x1a8] sm:$0xff]
        %v248 = vld [vmem:[%s168 + $0x1b0] sm:$0xff]
        %v249 = vld [vmem:[%s168 + $0x1b8] sm:$0xff]
        %v250 = vld [vmem:[%s168 + $0x1c0] sm:$0xff]
        %v251 = vld [vmem:[%s168 + $0x1c8] sm:$0xff]
        %v252 = vld [vmem:[%s168 + $0x1d0] sm:$0xff]
        %v253 = vld [vmem:[%s168 + $0x1d8] sm:$0xff]
        %v254 = vld [vmem:[%s168 + $0x1e0] sm:$0xff]
        %v255 = vld [vmem:[%s168 + $0x1e8] sm:$0xff]
        %v256 = vld [vmem:[%s168 + $0x1f0] sm:$0xff]
        %v257 = vld [vmem:[%s168 + $0x1f8] sm:$0xff]
        %v258 = vld [vmem:[%s168 + $0x200] sm:$0xff]
        %v259 = vld [vmem:[%s168 + $0x208] sm:$0xff]
        %v260 = vld [vmem:[%s168 + $0x210] sm:$0xff]
        %v261 = vld [vmem:[%s168 + $0x218] sm:$0xff]
        %v262 = vld [vmem:[%s168 + $0x220] sm:$0xff]
        %v263 = vld [vmem:[%s168 + $0x228] sm:$0xff]
        %v264 = vld [vmem:[%s168 + $0x230] sm:$0xff]
        %v265 = vld [vmem:[%s168 + $0x238] sm:$0xff]
        %v266 = vld [vmem:[%s168 + $0x240] sm:$0xff]
        %v267 = vld [vmem:[%s168 + $0x248] sm:$0xff]
        %v268 = vld [vmem:[%s168 + $0x250] sm:$0xff]
        %v269 = vld [vmem:[%s168 + $0x258] sm:$0xff]
        %v270 = vld [vmem:[%s168 + $0x260] sm:$0xff]
        %v271 = vld [vmem:[%s168 + $0x268] sm:$0xff]
        %v272 = vld [vmem:[%s168 + $0x270] sm:$0xff]
        %v273 = vld [vmem:[%s168 + $0x278] sm:$0xff]
        %v274 = vld [vmem:[%s1] sm:$0x1f]
        %s275 = smul.u32 %s20, 8
        %s276 = scalar_lea.vmem %s2, %s275
        %v277 = vld [vmem:[%s276] sm:$0xff]
        %v279 = vrot.slane %v277, 1
        %v280 = vrot.slane %v277, 2
        %v281 = vrot.slane %v277, 3
        %v282 = vrot.slane %v277, 4
        %v283 = vrot.slane %v277, 5
        %v284 = vrot.slane %v277, 6
        %v285 = vrot.slane %v277, 7
        %286 = vset.pattern.permute.xlu0 0
        %287 = vperm.xlu0 %286, %v277
        %v288 = vpop.permute.xlu0 %287
        %v290 = vperm.slane %v288, 0
        %291 = vset.pattern.permute.xlu0 0
        %292 = vperm.xlu0 %291, %v279
        %v293 = vpop.permute.xlu0 %292
        %v295 = vperm.slane %v293, 0
        %296 = vset.pattern.permute.xlu0 0
        %297 = vperm.xlu0 %296, %v280
        %v298 = vpop.permute.xlu0 %297
        %v300 = vperm.slane %v298, 0
        %301 = vset.pattern.permute.xlu0 0
        %302 = vperm.xlu0 %301, %v281
        %v303 = vpop.permute.xlu0 %302
        %v305 = vperm.slane %v303, 0
        %306 = vset.pattern.permute.xlu0 0
        %307 = vperm.xlu0 %306, %v282
        %v308 = vpop.permute.xlu0 %307
        %v310 = vperm.slane %v308, 0
        %311 = vset.pattern.permute.xlu0 0
        %312 = vperm.xlu0 %311, %v283
        %v313 = vpop.permute.xlu0 %312
        %v315 = vperm.slane %v313, 0
        %316 = vset.pattern.permute.xlu0 0
        %317 = vperm.xlu0 %316, %v284
        %v318 = vpop.permute.xlu0 %317
        %v320 = vperm.slane %v318, 0
        %321 = vset.pattern.permute.xlu0 0
        %322 = vperm.xlu0 %321, %v285
        %v323 = vpop.permute.xlu0 %322
        %v325 = vperm.slane %v323, 0
        %v327 = vperm.slane %v274, 0
        %v328 = vperm.slane %v274, 1
        %v329 = vperm.slane %v274, 2
        %v330 = vperm.slane %v274, 3
        %v331 = vperm.slane %v274, 4
        %337 = vmatpush.xpose.msra.mxu0 0.0
        %338 = vmatpush.xpose.msra.mxu0 0.0
        %339 = vmatpush.xpose.msra.mxu0 0.0
        %340 = vmatpush.xpose.msra.mxu0 0.0
        %341 = vmatpush.xpose.msra.mxu0 0.0
        %342 = vmatpush.xpose.msra.mxu0 0.0
        %343 = vmatpush.xpose.msra.mxu0 0.0
        %344 = vmatpush.xpose.msra.mxu0 0.0
        %345 = vmatpush.xpose.msra.mxu0 0.0
        %346 = vmatpush.xpose.msra.mxu0 0.0
        %347 = vmatpush.xpose.msra.mxu0 0.0
        %348 = vmatpush.xpose.msra.mxu0 0.0
        %349 = vmatpush.xpose.msra.mxu0 0.0
        %350 = vmatpush.xpose.msra.mxu0 0.0
        %351 = vmatpush.xpose.msra.mxu0 %v199
        %352 = vmatpush.xpose.msra.mxu0 %v194
        %353 = vmatmul.f32.gmra.mxu0 %v327
        %v354 = vpop.f32.mrf.mxu0
        %v355 = vadd.f32 %v290, %v354
        %356 = vdwg.mxu0
        %357 = vmatpush.xpose.msra.mxu0 0.0
        %358 = vmatpush.xpose.msra.mxu0 0.0
        %359 = vmatpush.xpose.msra.mxu0 0.0
        %360 = vmatpush.xpose.msra.mxu0 0.0
        %361 = vmatpush.xpose.msra.mxu0 0.0
        %362 = vmatpush.xpose.msra.mxu0 0.0
        %363 = vmatpush.xpose.msra.mxu0 0.0
        %364 = vmatpush.xpose.msra.mxu0 0.0
        %365 = vmatpush.xpose.msra.mxu0 0.0
        %366 = vmatpush.xpose.msra.mxu0 0.0
        %367 = vmatpush.xpose.msra.mxu0 0.0
        %368 = vmatpush.xpose.msra.mxu0 0.0
        %369 = vmatpush.xpose.msra.mxu0 0.0
        %370 = vmatpush.xpose.msra.mxu0 0.0
        %371 = vmatpush.xpose.msra.mxu0 %v200
        %372 = vmatpush.xpose.msra.mxu0 %v195
        %373 = vmatmul.f32.gmra.mxu0 %v328
        %v374 = vpop.f32.mrf.mxu0
        %v375 = vadd.f32 %v355, %v374
        %376 = vdwg.mxu0
        %377 = vmatpush.xpose.msra.mxu0 0.0
        %378 = vmatpush.xpose.msra.mxu0 0.0
        %379 = vmatpush.xpose.msra.mxu0 0.0
        %380 = vmatpush.xpose.msra.mxu0 0.0
        %381 = vmatpush.xpose.msra.mxu0 0.0
        %382 = vmatpush.xpose.msra.mxu0 0.0
        %383 = vmatpush.xpose.msra.mxu0 0.0
        %384 = vmatpush.xpose.msra.mxu0 0.0
        %385 = vmatpush.xpose.msra.mxu0 0.0
        %386 = vmatpush.xpose.msra.mxu0 0.0
        %387 = vmatpush.xpose.msra.mxu0 0.0
        %388 = vmatpush.xpose.msra.mxu0 0.0
        %389 = vmatpush.xpose.msra.mxu0 0.0
        %390 = vmatpush.xpose.msra.mxu0 0.0
        %391 = vmatpush.xpose.msra.mxu0 %v201
        %392 = vmatpush.xpose.msra.mxu0 %v196
        %393 = vmatmul.f32.gmra.mxu0 %v329
        %v394 = vpop.f32.mrf.mxu0
        %v395 = vadd.f32 %v375, %v394
        %396 = vdwg.mxu0
        %397 = vmatpush.xpose.msra.mxu0 0.0
        %398 = vmatpush.xpose.msra.mxu0 0.0
        %399 = vmatpush.xpose.msra.mxu0 0.0
        %400 = vmatpush.xpose.msra.mxu0 0.0
        %401 = vmatpush.xpose.msra.mxu0 0.0
        %402 = vmatpush.xpose.msra.mxu0 0.0
        %403 = vmatpush.xpose.msra.mxu0 0.0
        %404 = vmatpush.xpose.msra.mxu0 0.0
        %405 = vmatpush.xpose.msra.mxu0 0.0
        %406 = vmatpush.xpose.msra.mxu0 0.0
        %407 = vmatpush.xpose.msra.mxu0 0.0
        %408 = vmatpush.xpose.msra.mxu0 0.0
        %409 = vmatpush.xpose.msra.mxu0 0.0
        %410 = vmatpush.xpose.msra.mxu0 0.0
        %411 = vmatpush.xpose.msra.mxu0 %v202
        %412 = vmatpush.xpose.msra.mxu0 %v197
        %413 = vmatmul.f32.gmra.mxu0 %v330
        %v414 = vpop.f32.mrf.mxu0
        %v415 = vadd.f32 %v395, %v414
        %416 = vdwg.mxu0
        %417 = vmatpush.xpose.msra.mxu0 0.0
        %418 = vmatpush.xpose.msra.mxu0 0.0
        %419 = vmatpush.xpose.msra.mxu0 0.0
        %420 = vmatpush.xpose.msra.mxu0 0.0
        %421 = vmatpush.xpose.msra.mxu0 0.0
        %422 = vmatpush.xpose.msra.mxu0 0.0
        %423 = vmatpush.xpose.msra.mxu0 0.0
        %424 = vmatpush.xpose.msra.mxu0 0.0
        %425 = vmatpush.xpose.msra.mxu0 0.0
        %426 = vmatpush.xpose.msra.mxu0 0.0
        %427 = vmatpush.xpose.msra.mxu0 0.0
        %428 = vmatpush.xpose.msra.mxu0 0.0
        %429 = vmatpush.xpose.msra.mxu0 0.0
        %430 = vmatpush.xpose.msra.mxu0 0.0
        %431 = vmatpush.xpose.msra.mxu0 %v203
        %432 = vmatpush.xpose.msra.mxu0 %v198
        %433 = vmatmul.f32.gmra.mxu0 %v331
        %v434 = vpop.f32.mrf.mxu0
        %v435 = vadd.f32 %v415, %v434
        %436 = vdwg.mxu0
        %437 = vmatpush.xpose.msra.mxu0 0.0
        %438 = vmatpush.xpose.msra.mxu0 0.0
        %439 = vmatpush.xpose.msra.mxu0 0.0
        %440 = vmatpush.xpose.msra.mxu0 0.0
        %441 = vmatpush.xpose.msra.mxu0 0.0
        %442 = vmatpush.xpose.msra.mxu0 0.0
        %443 = vmatpush.xpose.msra.mxu0 0.0
        %444 = vmatpush.xpose.msra.mxu0 0.0
        %445 = vmatpush.xpose.msra.mxu0 0.0
        %446 = vmatpush.xpose.msra.mxu0 0.0
        %447 = vmatpush.xpose.msra.mxu0 0.0
        %448 = vmatpush.xpose.msra.mxu0 0.0
        %449 = vmatpush.xpose.msra.mxu0 0.0
        %450 = vmatpush.xpose.msra.mxu0 0.0
        %451 = vmatpush.xpose.msra.mxu0 %v209
        %452 = vmatpush.xpose.msra.mxu0 %v204
        %453 = vmatmul.f32.gmra.mxu0 %v327
        %v454 = vpop.f32.mrf.mxu0
        %v455 = vadd.f32 %v295, %v454
        %456 = vdwg.mxu0
        %457 = vmatpush.xpose.msra.mxu0 0.0
        %458 = vmatpush.xpose.msra.mxu0 0.0
        %459 = vmatpush.xpose.msra.mxu0 0.0
        %460 = vmatpush.xpose.msra.mxu0 0.0
        %461 = vmatpush.xpose.msra.mxu0 0.0
        %462 = vmatpush.xpose.msra.mxu0 0.0
        %463 = vmatpush.xpose.msra.mxu0 0.0
        %464 = vmatpush.xpose.msra.mxu0 0.0
        %465 = vmatpush.xpose.msra.mxu0 0.0
        %466 = vmatpush.xpose.msra.mxu0 0.0
        %467 = vmatpush.xpose.msra.mxu0 0.0
        %468 = vmatpush.xpose.msra.mxu0 0.0
        %469 = vmatpush.xpose.msra.mxu0 0.0
        %470 = vmatpush.xpose.msra.mxu0 0.0
        %471 = vmatpush.xpose.msra.mxu0 %v210
        %472 = vmatpush.xpose.msra.mxu0 %v205
        %473 = vmatmul.f32.gmra.mxu0 %v328
        %v474 = vpop.f32.mrf.mxu0
        %v475 = vadd.f32 %v455, %v474
        %476 = vdwg.mxu0
        %477 = vmatpush.xpose.msra.mxu0 0.0
        %478 = vmatpush.xpose.msra.mxu0 0.0
        %479 = vmatpush.xpose.msra.mxu0 0.0
        %480 = vmatpush.xpose.msra.mxu0 0.0
        %481 = vmatpush.xpose.msra.mxu0 0.0
        %482 = vmatpush.xpose.msra.mxu0 0.0
        %483 = vmatpush.xpose.msra.mxu0 0.0
        %484 = vmatpush.xpose.msra.mxu0 0.0
        %485 = vmatpush.xpose.msra.mxu0 0.0
        %486 = vmatpush.xpose.msra.mxu0 0.0
        %487 = vmatpush.xpose.msra.mxu0 0.0
        %488 = vmatpush.xpose.msra.mxu0 0.0
        %489 = vmatpush.xpose.msra.mxu0 0.0
        %490 = vmatpush.xpose.msra.mxu0 0.0
        %491 = vmatpush.xpose.msra.mxu0 %v211
        %492 = vmatpush.xpose.msra.mxu0 %v206
        %493 = vmatmul.f32.gmra.mxu0 %v329
        %v494 = vpop.f32.mrf.mxu0
        %v495 = vadd.f32 %v475, %v494
        %496 = vdwg.mxu0
        %497 = vmatpush.xpose.msra.mxu0 0.0
        %498 = vmatpush.xpose.msra.mxu0 0.0
        %499 = vmatpush.xpose.msra.mxu0 0.0
        %500 = vmatpush.xpose.msra.mxu0 0.0
        %501 = vmatpush.xpose.msra.mxu0 0.0
        %502 = vmatpush.xpose.msra.mxu0 0.0
        %503 = vmatpush.xpose.msra.mxu0 0.0
        %504 = vmatpush.xpose.msra.mxu0 0.0
        %505 = vmatpush.xpose.msra.mxu0 0.0
        %506 = vmatpush.xpose.msra.mxu0 0.0
        %507 = vmatpush.xpose.msra.mxu0 0.0
        %508 = vmatpush.xpose.msra.mxu0 0.0
        %509 = vmatpush.xpose.msra.mxu0 0.0
        %510 = vmatpush.xpose.msra.mxu0 0.0
        %511 = vmatpush.xpose.msra.mxu0 %v212
        %512 = vmatpush.xpose.msra.mxu0 %v207
        %513 = vmatmul.f32.gmra.mxu0 %v330
        %v514 = vpop.f32.mrf.mxu0
        %v515 = vadd.f32 %v495, %v514
        %516 = vdwg.mxu0
        %517 = vmatpush.xpose.msra.mxu0 0.0
        %518 = vmatpush.xpose.msra.mxu0 0.0
        %519 = vmatpush.xpose.msra.mxu0 0.0
        %520 = vmatpush.xpose.msra.mxu0 0.0
        %521 = vmatpush.xpose.msra.mxu0 0.0
        %522 = vmatpush.xpose.msra.mxu0 0.0
        %523 = vmatpush.xpose.msra.mxu0 0.0
        %524 = vmatpush.xpose.msra.mxu0 0.0
        %525 = vmatpush.xpose.msra.mxu0 0.0
        %526 = vmatpush.xpose.msra.mxu0 0.0
        %527 = vmatpush.xpose.msra.mxu0 0.0
        %528 = vmatpush.xpose.msra.mxu0 0.0
        %529 = vmatpush.xpose.msra.mxu0 0.0
        %530 = vmatpush.xpose.msra.mxu0 0.0
        %531 = vmatpush.xpose.msra.mxu0 %v213
        %532 = vmatpush.xpose.msra.mxu0 %v208
        %533 = vmatmul.f32.gmra.mxu0 %v331
        %v534 = vpop.f32.mrf.mxu0
        %v535 = vadd.f32 %v515, %v534
        %536 = vdwg.mxu0
        %537 = vmatpush.xpose.msra.mxu0 0.0
        %538 = vmatpush.xpose.msra.mxu0 0.0
        %539 = vmatpush.xpose.msra.mxu0 0.0
        %540 = vmatpush.xpose.msra.mxu0 0.0
        %541 = vmatpush.xpose.msra.mxu0 0.0
        %542 = vmatpush.xpose.msra.mxu0 0.0
        %543 = vmatpush.xpose.msra.mxu0 0.0
        %544 = vmatpush.xpose.msra.mxu0 0.0
        %545 = vmatpush.xpose.msra.mxu0 0.0
        %546 = vmatpush.xpose.msra.mxu0 0.0
        %547 = vmatpush.xpose.msra.mxu0 0.0
        %548 = vmatpush.xpose.msra.mxu0 0.0
        %549 = vmatpush.xpose.msra.mxu0 0.0
        %550 = vmatpush.xpose.msra.mxu0 0.0
        %551 = vmatpush.xpose.msra.mxu0 %v219
        %552 = vmatpush.xpose.msra.mxu0 %v214
        %553 = vmatmul.f32.gmra.mxu0 %v327
        %v554 = vpop.f32.mrf.mxu0
        %v555 = vadd.f32 %v300, %v554
        %556 = vdwg.mxu0
        %557 = vmatpush.xpose.msra.mxu0 0.0
        %558 = vmatpush.xpose.msra.mxu0 0.0
        %559 = vmatpush.xpose.msra.mxu0 0.0
        %560 = vmatpush.xpose.msra.mxu0 0.0
        %561 = vmatpush.xpose.msra.mxu0 0.0
        %562 = vmatpush.xpose.msra.mxu0 0.0
        %563 = vmatpush.xpose.msra.mxu0 0.0
        %564 = vmatpush.xpose.msra.mxu0 0.0
        %565 = vmatpush.xpose.msra.mxu0 0.0
        %566 = vmatpush.xpose.msra.mxu0 0.0
        %567 = vmatpush.xpose.msra.mxu0 0.0
        %568 = vmatpush.xpose.msra.mxu0 0.0
        %569 = vmatpush.xpose.msra.mxu0 0.0
        %570 = vmatpush.xpose.msra.mxu0 0.0
        %571 = vmatpush.xpose.msra.mxu0 %v220
        %572 = vmatpush.xpose.msra.mxu0 %v215
        %573 = vmatmul.f32.gmra.mxu0 %v328
        %v574 = vpop.f32.mrf.mxu0
        %v575 = vadd.f32 %v555, %v574
        %576 = vdwg.mxu0
        %577 = vmatpush.xpose.msra.mxu0 0.0
        %578 = vmatpush.xpose.msra.mxu0 0.0
        %579 = vmatpush.xpose.msra.mxu0 0.0
        %580 = vmatpush.xpose.msra.mxu0 0.0
        %581 = vmatpush.xpose.msra.mxu0 0.0
        %582 = vmatpush.xpose.msra.mxu0 0.0
        %583 = vmatpush.xpose.msra.mxu0 0.0
        %584 = vmatpush.xpose.msra.mxu0 0.0
        %585 = vmatpush.xpose.msra.mxu0 0.0
        %586 = vmatpush.xpose.msra.mxu0 0.0
        %587 = vmatpush.xpose.msra.mxu0 0.0
        %588 = vmatpush.xpose.msra.mxu0 0.0
        %589 = vmatpush.xpose.msra.mxu0 0.0
        %590 = vmatpush.xpose.msra.mxu0 0.0
        %591 = vmatpush.xpose.msra.mxu0 %v221
        %592 = vmatpush.xpose.msra.mxu0 %v216
        %593 = vmatmul.f32.gmra.mxu0 %v329
        %v594 = vpop.f32.mrf.mxu0
        %v595 = vadd.f32 %v575, %v594
        %596 = vdwg.mxu0
        %597 = vmatpush.xpose.msra.mxu0 0.0
        %598 = vmatpush.xpose.msra.mxu0 0.0
        %599 = vmatpush.xpose.msra.mxu0 0.0
        %600 = vmatpush.xpose.msra.mxu0 0.0
        %601 = vmatpush.xpose.msra.mxu0 0.0
        %602 = vmatpush.xpose.msra.mxu0 0.0
        %603 = vmatpush.xpose.msra.mxu0 0.0
        %604 = vmatpush.xpose.msra.mxu0 0.0
        %605 = vmatpush.xpose.msra.mxu0 0.0
        %606 = vmatpush.xpose.msra.mxu0 0.0
        %607 = vmatpush.xpose.msra.mxu0 0.0
        %608 = vmatpush.xpose.msra.mxu0 0.0
        %609 = vmatpush.xpose.msra.mxu0 0.0
        %610 = vmatpush.xpose.msra.mxu0 0.0
        %611 = vmatpush.xpose.msra.mxu0 %v222
        %612 = vmatpush.xpose.msra.mxu0 %v217
        %613 = vmatmul.f32.gmra.mxu0 %v330
        %v614 = vpop.f32.mrf.mxu0
        %v615 = vadd.f32 %v595, %v614
        %616 = vdwg.mxu0
        %617 = vmatpush.xpose.msra.mxu0 0.0
        %618 = vmatpush.xpose.msra.mxu0 0.0
        %619 = vmatpush.xpose.msra.mxu0 0.0
        %620 = vmatpush.xpose.msra.mxu0 0.0
        %621 = vmatpush.xpose.msra.mxu0 0.0
        %622 = vmatpush.xpose.msra.mxu0 0.0
        %623 = vmatpush.xpose.msra.mxu0 0.0
        %624 = vmatpush.xpose.msra.mxu0 0.0
        %625 = vmatpush.xpose.msra.mxu0 0.0
        %626 = vmatpush.xpose.msra.mxu0 0.0
        %627 = vmatpush.xpose.msra.mxu0 0.0
        %628 = vmatpush.xpose.msra.mxu0 0.0
        %629 = vmatpush.xpose.msra.mxu0 0.0
        %630 = vmatpush.xpose.msra.mxu0 0.0
        %631 = vmatpush.xpose.msra.mxu0 %v223
        %632 = vmatpush.xpose.msra.mxu0 %v218
        %633 = vmatmul.f32.gmra.mxu0 %v331
        %v634 = vpop.f32.mrf.mxu0
        %v635 = vadd.f32 %v615, %v634
        %636 = vdwg.mxu0
        %637 = vmatpush.xpose.msra.mxu0 0.0
        %638 = vmatpush.xpose.msra.mxu0 0.0
        %639 = vmatpush.xpose.msra.mxu0 0.0
        %640 = vmatpush.xpose.msra.mxu0 0.0
        %641 = vmatpush.xpose.msra.mxu0 0.0
        %642 = vmatpush.xpose.msra.mxu0 0.0
        %643 = vmatpush.xpose.msra.mxu0 0.0
        %644 = vmatpush.xpose.msra.mxu0 0.0
        %645 = vmatpush.xpose.msra.mxu0 0.0
        %646 = vmatpush.xpose.msra.mxu0 0.0
        %647 = vmatpush.xpose.msra.mxu0 0.0
        %648 = vmatpush.xpose.msra.mxu0 0.0
        %649 = vmatpush.xpose.msra.mxu0 0.0
        %650 = vmatpush.xpose.msra.mxu0 0.0
        %651 = vmatpush.xpose.msra.mxu0 %v229
        %652 = vmatpush.xpose.msra.mxu0 %v224
        %653 = vmatmul.f32.gmra.mxu0 %v327
        %v654 = vpop.f32.mrf.mxu0
        %v655 = vadd.f32 %v305, %v654
        %656 = vdwg.mxu0
        %657 = vmatpush.xpose.msra.mxu0 0.0
        %658 = vmatpush.xpose.msra.mxu0 0.0
        %659 = vmatpush.xpose.msra.mxu0 0.0
        %660 = vmatpush.xpose.msra.mxu0 0.0
        %661 = vmatpush.xpose.msra.mxu0 0.0
        %662 = vmatpush.xpose.msra.mxu0 0.0
        %663 = vmatpush.xpose.msra.mxu0 0.0
        %664 = vmatpush.xpose.msra.mxu0 0.0
        %665 = vmatpush.xpose.msra.mxu0 0.0
        %666 = vmatpush.xpose.msra.mxu0 0.0
        %667 = vmatpush.xpose.msra.mxu0 0.0
        %668 = vmatpush.xpose.msra.mxu0 0.0
        %669 = vmatpush.xpose.msra.mxu0 0.0
        %670 = vmatpush.xpose.msra.mxu0 0.0
        %671 = vmatpush.xpose.msra.mxu0 %v230
        %672 = vmatpush.xpose.msra.mxu0 %v225
        %673 = vmatmul.f32.gmra.mxu0 %v328
        %v674 = vpop.f32.mrf.mxu0
        %v675 = vadd.f32 %v655, %v674
        %676 = vdwg.mxu0
        %677 = vmatpush.xpose.msra.mxu0 0.0
        %678 = vmatpush.xpose.msra.mxu0 0.0
        %679 = vmatpush.xpose.msra.mxu0 0.0
        %680 = vmatpush.xpose.msra.mxu0 0.0
        %681 = vmatpush.xpose.msra.mxu0 0.0
        %682 = vmatpush.xpose.msra.mxu0 0.0
        %683 = vmatpush.xpose.msra.mxu0 0.0
        %684 = vmatpush.xpose.msra.mxu0 0.0
        %685 = vmatpush.xpose.msra.mxu0 0.0
        %686 = vmatpush.xpose.msra.mxu0 0.0
        %687 = vmatpush.xpose.msra.mxu0 0.0
        %688 = vmatpush.xpose.msra.mxu0 0.0
        %689 = vmatpush.xpose.msra.mxu0 0.0
        %690 = vmatpush.xpose.msra.mxu0 0.0
        %691 = vmatpush.xpose.msra.mxu0 %v231
        %692 = vmatpush.xpose.msra.mxu0 %v226
        %693 = vmatmul.f32.gmra.mxu0 %v329
        %v694 = vpop.f32.mrf.mxu0
        %v695 = vadd.f32 %v675, %v694
        %696 = vdwg.mxu0
        %697 = vmatpush.xpose.msra.mxu0 0.0
        %698 = vmatpush.xpose.msra.mxu0 0.0
        %699 = vmatpush.xpose.msra.mxu0 0.0
        %700 = vmatpush.xpose.msra.mxu0 0.0
        %701 = vmatpush.xpose.msra.mxu0 0.0
        %702 = vmatpush.xpose.msra.mxu0 0.0
        %703 = vmatpush.xpose.msra.mxu0 0.0
        %704 = vmatpush.xpose.msra.mxu0 0.0
        %705 = vmatpush.xpose.msra.mxu0 0.0
        %706 = vmatpush.xpose.msra.mxu0 0.0
        %707 = vmatpush.xpose.msra.mxu0 0.0
        %708 = vmatpush.xpose.msra.mxu0 0.0
        %709 = vmatpush.xpose.msra.mxu0 0.0
        %710 = vmatpush.xpose.msra.mxu0 0.0
        %711 = vmatpush.xpose.msra.mxu0 %v232
        %712 = vmatpush.xpose.msra.mxu0 %v227
        %713 = vmatmul.f32.gmra.mxu0 %v330
        %v714 = vpop.f32.mrf.mxu0
        %v715 = vadd.f32 %v695, %v714
        %716 = vdwg.mxu0
        %717 = vmatpush.xpose.msra.mxu0 0.0
        %718 = vmatpush.xpose.msra.mxu0 0.0
        %719 = vmatpush.xpose.msra.mxu0 0.0
        %720 = vmatpush.xpose.msra.mxu0 0.0
        %721 = vmatpush.xpose.msra.mxu0 0.0
        %722 = vmatpush.xpose.msra.mxu0 0.0
        %723 = vmatpush.xpose.msra.mxu0 0.0
        %724 = vmatpush.xpose.msra.mxu0 0.0
        %725 = vmatpush.xpose.msra.mxu0 0.0
        %726 = vmatpush.xpose.msra.mxu0 0.0
        %727 = vmatpush.xpose.msra.mxu0 0.0
        %728 = vmatpush.xpose.msra.mxu0 0.0
        %729 = vmatpush.xpose.msra.mxu0 0.0
        %730 = vmatpush.xpose.msra.mxu0 0.0
        %731 = vmatpush.xpose.msra.mxu0 %v233
        %732 = vmatpush.xpose.msra.mxu0 %v228
        %733 = vmatmul.f32.gmra.mxu0 %v331
        %v734 = vpop.f32.mrf.mxu0
        %v735 = vadd.f32 %v715, %v734
        %736 = vdwg.mxu0
        %737 = vmatpush.xpose.msra.mxu0 0.0
        %738 = vmatpush.xpose.msra.mxu0 0.0
        %739 = vmatpush.xpose.msra.mxu0 0.0
        %740 = vmatpush.xpose.msra.mxu0 0.0
        %741 = vmatpush.xpose.msra.mxu0 0.0
        %742 = vmatpush.xpose.msra.mxu0 0.0
        %743 = vmatpush.xpose.msra.mxu0 0.0
        %744 = vmatpush.xpose.msra.mxu0 0.0
        %745 = vmatpush.xpose.msra.mxu0 0.0
        %746 = vmatpush.xpose.msra.mxu0 0.0
        %747 = vmatpush.xpose.msra.mxu0 0.0
        %748 = vmatpush.xpose.msra.mxu0 0.0
        %749 = vmatpush.xpose.msra.mxu0 0.0
        %750 = vmatpush.xpose.msra.mxu0 0.0
        %751 = vmatpush.xpose.msra.mxu0 %v239
        %752 = vmatpush.xpose.msra.mxu0 %v234
        %753 = vmatmul.f32.gmra.mxu0 %v327
        %v754 = vpop.f32.mrf.mxu0
        %v755 = vadd.f32 %v310, %v754
        %756 = vdwg.mxu0
        %757 = vmatpush.xpose.msra.mxu0 0.0
        %758 = vmatpush.xpose.msra.mxu0 0.0
        %759 = vmatpush.xpose.msra.mxu0 0.0
        %760 = vmatpush.xpose.msra.mxu0 0.0
        %761 = vmatpush.xpose.msra.mxu0 0.0
        %762 = vmatpush.xpose.msra.mxu0 0.0
        %763 = vmatpush.xpose.msra.mxu0 0.0
        %764 = vmatpush.xpose.msra.mxu0 0.0
        %765 = vmatpush.xpose.msra.mxu0 0.0
        %766 = vmatpush.xpose.msra.mxu0 0.0
        %767 = vmatpush.xpose.msra.mxu0 0.0
        %768 = vmatpush.xpose.msra.mxu0 0.0
        %769 = vmatpush.xpose.msra.mxu0 0.0
        %770 = vmatpush.xpose.msra.mxu0 0.0
        %771 = vmatpush.xpose.msra.mxu0 %v240
        %772 = vmatpush.xpose.msra.mxu0 %v235
        %773 = vmatmul.f32.gmra.mxu0 %v328
        %v774 = vpop.f32.mrf.mxu0
        %v775 = vadd.f32 %v755, %v774
        %776 = vdwg.mxu0
        %777 = vmatpush.xpose.msra.mxu0 0.0
        %778 = vmatpush.xpose.msra.mxu0 0.0
        %779 = vmatpush.xpose.msra.mxu0 0.0
        %780 = vmatpush.xpose.msra.mxu0 0.0
        %781 = vmatpush.xpose.msra.mxu0 0.0
        %782 = vmatpush.xpose.msra.mxu0 0.0
        %783 = vmatpush.xpose.msra.mxu0 0.0
        %784 = vmatpush.xpose.msra.mxu0 0.0
        %785 = vmatpush.xpose.msra.mxu0 0.0
        %786 = vmatpush.xpose.msra.mxu0 0.0
        %787 = vmatpush.xpose.msra.mxu0 0.0
        %788 = vmatpush.xpose.msra.mxu0 0.0
        %789 = vmatpush.xpose.msra.mxu0 0.0
        %790 = vmatpush.xpose.msra.mxu0 0.0
        %791 = vmatpush.xpose.msra.mxu0 %v241
        %792 = vmatpush.xpose.msra.mxu0 %v236
        %793 = vmatmul.f32.gmra.mxu0 %v329
        %v794 = vpop.f32.mrf.mxu0
        %v795 = vadd.f32 %v775, %v794
        %796 = vdwg.mxu0
        %797 = vmatpush.xpose.msra.mxu0 0.0
        %798 = vmatpush.xpose.msra.mxu0 0.0
        %799 = vmatpush.xpose.msra.mxu0 0.0
        %800 = vmatpush.xpose.msra.mxu0 0.0
        %801 = vmatpush.xpose.msra.mxu0 0.0
        %802 = vmatpush.xpose.msra.mxu0 0.0
        %803 = vmatpush.xpose.msra.mxu0 0.0
        %804 = vmatpush.xpose.msra.mxu0 0.0
        %805 = vmatpush.xpose.msra.mxu0 0.0
        %806 = vmatpush.xpose.msra.mxu0 0.0
        %807 = vmatpush.xpose.msra.mxu0 0.0
        %808 = vmatpush.xpose.msra.mxu0 0.0
        %809 = vmatpush.xpose.msra.mxu0 0.0
        %810 = vmatpush.xpose.msra.mxu0 0.0
        %811 = vmatpush.xpose.msra.mxu0 %v242
        %812 = vmatpush.xpose.msra.mxu0 %v237
        %813 = vmatmul.f32.gmra.mxu0 %v330
        %v814 = vpop.f32.mrf.mxu0
        %v815 = vadd.f32 %v795, %v814
        %816 = vdwg.mxu0
        %817 = vmatpush.xpose.msra.mxu0 0.0
        %818 = vmatpush.xpose.msra.mxu0 0.0
        %819 = vmatpush.xpose.msra.mxu0 0.0
        %820 = vmatpush.xpose.msra.mxu0 0.0
        %821 = vmatpush.xpose.msra.mxu0 0.0
        %822 = vmatpush.xpose.msra.mxu0 0.0
        %823 = vmatpush.xpose.msra.mxu0 0.0
        %824 = vmatpush.xpose.msra.mxu0 0.0
        %825 = vmatpush.xpose.msra.mxu0 0.0
        %826 = vmatpush.xpose.msra.mxu0 0.0
        %827 = vmatpush.xpose.msra.mxu0 0.0
        %828 = vmatpush.xpose.msra.mxu0 0.0
        %829 = vmatpush.xpose.msra.mxu0 0.0
        %830 = vmatpush.xpose.msra.mxu0 0.0
        %831 = vmatpush.xpose.msra.mxu0 %v243
        %832 = vmatpush.xpose.msra.mxu0 %v238
        %833 = vmatmul.f32.gmra.mxu0 %v331
        %v834 = vpop.f32.mrf.mxu0
        %v835 = vadd.f32 %v815, %v834
        %836 = vdwg.mxu0
        %837 = vmatpush.xpose.msra.mxu0 0.0
        %838 = vmatpush.xpose.msra.mxu0 0.0
        %839 = vmatpush.xpose.msra.mxu0 0.0
        %840 = vmatpush.xpose.msra.mxu0 0.0
        %841 = vmatpush.xpose.msra.mxu0 0.0
        %842 = vmatpush.xpose.msra.mxu0 0.0
        %843 = vmatpush.xpose.msra.mxu0 0.0
        %844 = vmatpush.xpose.msra.mxu0 0.0
        %845 = vmatpush.xpose.msra.mxu0 0.0
        %846 = vmatpush.xpose.msra.mxu0 0.0
        %847 = vmatpush.xpose.msra.mxu0 0.0
        %848 = vmatpush.xpose.msra.mxu0 0.0
        %849 = vmatpush.xpose.msra.mxu0 0.0
        %850 = vmatpush.xpose.msra.mxu0 0.0
        %851 = vmatpush.xpose.msra.mxu0 %v249
        %852 = vmatpush.xpose.msra.mxu0 %v244
        %853 = vmatmul.f32.gmra.mxu0 %v327
        %v854 = vpop.f32.mrf.mxu0
        %v855 = vadd.f32 %v315, %v854
        %856 = vdwg.mxu0
        %857 = vmatpush.xpose.msra.mxu0 0.0
        %858 = vmatpush.xpose.msra.mxu0 0.0
        %859 = vmatpush.xpose.msra.mxu0 0.0
        %860 = vmatpush.xpose.msra.mxu0 0.0
        %861 = vmatpush.xpose.msra.mxu0 0.0
        %862 = vmatpush.xpose.msra.mxu0 0.0
        %863 = vmatpush.xpose.msra.mxu0 0.0
        %864 = vmatpush.xpose.msra.mxu0 0.0
        %865 = vmatpush.xpose.msra.mxu0 0.0
        %866 = vmatpush.xpose.msra.mxu0 0.0
        %867 = vmatpush.xpose.msra.mxu0 0.0
        %868 = vmatpush.xpose.msra.mxu0 0.0
        %869 = vmatpush.xpose.msra.mxu0 0.0
        %870 = vmatpush.xpose.msra.mxu0 0.0
        %871 = vmatpush.xpose.msra.mxu0 %v250
        %872 = vmatpush.xpose.msra.mxu0 %v245
        %873 = vmatmul.f32.gmra.mxu0 %v328
        %v874 = vpop.f32.mrf.mxu0
        %v875 = vadd.f32 %v855, %v874
        %876 = vdwg.mxu0
        %877 = vmatpush.xpose.msra.mxu0 0.0
        %878 = vmatpush.xpose.msra.mxu0 0.0
        %879 = vmatpush.xpose.msra.mxu0 0.0
        %880 = vmatpush.xpose.msra.mxu0 0.0
        %881 = vmatpush.xpose.msra.mxu0 0.0
        %882 = vmatpush.xpose.msra.mxu0 0.0
        %883 = vmatpush.xpose.msra.mxu0 0.0
        %884 = vmatpush.xpose.msra.mxu0 0.0
        %885 = vmatpush.xpose.msra.mxu0 0.0
        %886 = vmatpush.xpose.msra.mxu0 0.0
        %887 = vmatpush.xpose.msra.mxu0 0.0
        %888 = vmatpush.xpose.msra.mxu0 0.0
        %889 = vmatpush.xpose.msra.mxu0 0.0
        %890 = vmatpush.xpose.msra.mxu0 0.0
        %891 = vmatpush.xpose.msra.mxu0 %v251
        %892 = vmatpush.xpose.msra.mxu0 %v246
        %893 = vmatmul.f32.gmra.mxu0 %v329
        %v894 = vpop.f32.mrf.mxu0
        %v895 = vadd.f32 %v875, %v894
        %896 = vdwg.mxu0
        %897 = vmatpush.xpose.msra.mxu0 0.0
        %898 = vmatpush.xpose.msra.mxu0 0.0
        %899 = vmatpush.xpose.msra.mxu0 0.0
        %900 = vmatpush.xpose.msra.mxu0 0.0
        %901 = vmatpush.xpose.msra.mxu0 0.0
        %902 = vmatpush.xpose.msra.mxu0 0.0
        %903 = vmatpush.xpose.msra.mxu0 0.0
        %904 = vmatpush.xpose.msra.mxu0 0.0
        %905 = vmatpush.xpose.msra.mxu0 0.0
        %906 = vmatpush.xpose.msra.mxu0 0.0
        %907 = vmatpush.xpose.msra.mxu0 0.0
        %908 = vmatpush.xpose.msra.mxu0 0.0
        %909 = vmatpush.xpose.msra.mxu0 0.0
        %910 = vmatpush.xpose.msra.mxu0 0.0
        %911 = vmatpush.xpose.msra.mxu0 %v252
        %912 = vmatpush.xpose.msra.mxu0 %v247
        %913 = vmatmul.f32.gmra.mxu0 %v330
        %v914 = vpop.f32.mrf.mxu0
        %v915 = vadd.f32 %v895, %v914
        %916 = vdwg.mxu0
        %917 = vmatpush.xpose.msra.mxu0 0.0
        %918 = vmatpush.xpose.msra.mxu0 0.0
        %919 = vmatpush.xpose.msra.mxu0 0.0
        %920 = vmatpush.xpose.msra.mxu0 0.0
        %921 = vmatpush.xpose.msra.mxu0 0.0
        %922 = vmatpush.xpose.msra.mxu0 0.0
        %923 = vmatpush.xpose.msra.mxu0 0.0
        %924 = vmatpush.xpose.msra.mxu0 0.0
        %925 = vmatpush.xpose.msra.mxu0 0.0
        %926 = vmatpush.xpose.msra.mxu0 0.0
        %927 = vmatpush.xpose.msra.mxu0 0.0
        %928 = vmatpush.xpose.msra.mxu0 0.0
        %929 = vmatpush.xpose.msra.mxu0 0.0
        %930 = vmatpush.xpose.msra.mxu0 0.0
        %931 = vmatpush.xpose.msra.mxu0 %v253
        %932 = vmatpush.xpose.msra.mxu0 %v248
        %933 = vmatmul.f32.gmra.mxu0 %v331
        %v934 = vpop.f32.mrf.mxu0
        %v935 = vadd.f32 %v915, %v934
        %936 = vdwg.mxu0
        %937 = vmatpush.xpose.msra.mxu0 0.0
        %938 = vmatpush.xpose.msra.mxu0 0.0
        %939 = vmatpush.xpose.msra.mxu0 0.0
        %940 = vmatpush.xpose.msra.mxu0 0.0
        %941 = vmatpush.xpose.msra.mxu0 0.0
        %942 = vmatpush.xpose.msra.mxu0 0.0
        %943 = vmatpush.xpose.msra.mxu0 0.0
        %944 = vmatpush.xpose.msra.mxu0 0.0
        %945 = vmatpush.xpose.msra.mxu0 0.0
        %946 = vmatpush.xpose.msra.mxu0 0.0
        %947 = vmatpush.xpose.msra.mxu0 0.0
        %948 = vmatpush.xpose.msra.mxu0 0.0
        %949 = vmatpush.xpose.msra.mxu0 0.0
        %950 = vmatpush.xpose.msra.mxu0 0.0
        %951 = vmatpush.xpose.msra.mxu0 %v259
        %952 = vmatpush.xpose.msra.mxu0 %v254
        %953 = vmatmul.f32.gmra.mxu0 %v327
        %v954 = vpop.f32.mrf.mxu0
        %v955 = vadd.f32 %v320, %v954
        %956 = vdwg.mxu0
        %957 = vmatpush.xpose.msra.mxu0 0.0
        %958 = vmatpush.xpose.msra.mxu0 0.0
        %959 = vmatpush.xpose.msra.mxu0 0.0
        %960 = vmatpush.xpose.msra.mxu0 0.0
        %961 = vmatpush.xpose.msra.mxu0 0.0
        %962 = vmatpush.xpose.msra.mxu0 0.0
        %963 = vmatpush.xpose.msra.mxu0 0.0
        %964 = vmatpush.xpose.msra.mxu0 0.0
        %965 = vmatpush.xpose.msra.mxu0 0.0
        %966 = vmatpush.xpose.msra.mxu0 0.0
        %967 = vmatpush.xpose.msra.mxu0 0.0
        %968 = vmatpush.xpose.msra.mxu0 0.0
        %969 = vmatpush.xpose.msra.mxu0 0.0
        %970 = vmatpush.xpose.msra.mxu0 0.0
        %971 = vmatpush.xpose.msra.mxu0 %v260
        %972 = vmatpush.xpose.msra.mxu0 %v255
        %973 = vmatmul.f32.gmra.mxu0 %v328
        %v974 = vpop.f32.mrf.mxu0
        %v975 = vadd.f32 %v955, %v974
        %976 = vdwg.mxu0
        %977 = vmatpush.xpose.msra.mxu0 0.0
        %978 = vmatpush.xpose.msra.mxu0 0.0
        %979 = vmatpush.xpose.msra.mxu0 0.0
        %980 = vmatpush.xpose.msra.mxu0 0.0
        %981 = vmatpush.xpose.msra.mxu0 0.0
        %982 = vmatpush.xpose.msra.mxu0 0.0
        %983 = vmatpush.xpose.msra.mxu0 0.0
        %984 = vmatpush.xpose.msra.mxu0 0.0
        %985 = vmatpush.xpose.msra.mxu0 0.0
        %986 = vmatpush.xpose.msra.mxu0 0.0
        %987 = vmatpush.xpose.msra.mxu0 0.0
        %988 = vmatpush.xpose.msra.mxu0 0.0
        %989 = vmatpush.xpose.msra.mxu0 0.0
        %990 = vmatpush.xpose.msra.mxu0 0.0
        %991 = vmatpush.xpose.msra.mxu0 %v261
        %992 = vmatpush.xpose.msra.mxu0 %v256
        %993 = vmatmul.f32.gmra.mxu0 %v329
        %v994 = vpop.f32.mrf.mxu0
        %v995 = vadd.f32 %v975, %v994
        %996 = vdwg.mxu0
        %997 = vmatpush.xpose.msra.mxu0 0.0
        %998 = vmatpush.xpose.msra.mxu0 0.0
        %999 = vmatpush.xpose.msra.mxu0 0.0
        %1000 = vmatpush.xpose.msra.mxu0 0.0
        %1001 = vmatpush.xpose.msra.mxu0 0.0
        %1002 = vmatpush.xpose.msra.mxu0 0.0
        %1003 = vmatpush.xpose.msra.mxu0 0.0
        %1004 = vmatpush.xpose.msra.mxu0 0.0
        %1005 = vmatpush.xpose.msra.mxu0 0.0
        %1006 = vmatpush.xpose.msra.mxu0 0.0
        %1007 = vmatpush.xpose.msra.mxu0 0.0
        %1008 = vmatpush.xpose.msra.mxu0 0.0
        %1009 = vmatpush.xpose.msra.mxu0 0.0
        %1010 = vmatpush.xpose.msra.mxu0 0.0
        %1011 = vmatpush.xpose.msra.mxu0 %v262
        %1012 = vmatpush.xpose.msra.mxu0 %v257
        %1013 = vmatmul.f32.gmra.mxu0 %v330
        %v1014 = vpop.f32.mrf.mxu0
        %v1015 = vadd.f32 %v995, %v1014
        %1016 = vdwg.mxu0
        %1017 = vmatpush.xpose.msra.mxu0 0.0
        %1018 = vmatpush.xpose.msra.mxu0 0.0
        %1019 = vmatpush.xpose.msra.mxu0 0.0
        %1020 = vmatpush.xpose.msra.mxu0 0.0
        %1021 = vmatpush.xpose.msra.mxu0 0.0
        %1022 = vmatpush.xpose.msra.mxu0 0.0
        %1023 = vmatpush.xpose.msra.mxu0 0.0
        %1024 = vmatpush.xpose.msra.mxu0 0.0
        %1025 = vmatpush.xpose.msra.mxu0 0.0
        %1026 = vmatpush.xpose.msra.mxu0 0.0
        %1027 = vmatpush.xpose.msra.mxu0 0.0
        %1028 = vmatpush.xpose.msra.mxu0 0.0
        %1029 = vmatpush.xpose.msra.mxu0 0.0
        %1030 = vmatpush.xpose.msra.mxu0 0.0
        %1031 = vmatpush.xpose.msra.mxu0 %v263
        %1032 = vmatpush.xpose.msra.mxu0 %v258
        %1033 = vmatmul.f32.gmra.mxu0 %v331
        %v1034 = vpop.f32.mrf.mxu0
        %v1035 = vadd.f32 %v1015, %v1034
        %1036 = vdwg.mxu0
        %1037 = vmatpush.xpose.msra.mxu0 0.0
        %1038 = vmatpush.xpose.msra.mxu0 0.0
        %1039 = vmatpush.xpose.msra.mxu0 0.0
        %1040 = vmatpush.xpose.msra.mxu0 0.0
        %1041 = vmatpush.xpose.msra.mxu0 0.0
        %1042 = vmatpush.xpose.msra.mxu0 0.0
        %1043 = vmatpush.xpose.msra.mxu0 0.0
        %1044 = vmatpush.xpose.msra.mxu0 0.0
        %1045 = vmatpush.xpose.msra.mxu0 0.0
        %1046 = vmatpush.xpose.msra.mxu0 0.0
        %1047 = vmatpush.xpose.msra.mxu0 0.0
        %1048 = vmatpush.xpose.msra.mxu0 0.0
        %1049 = vmatpush.xpose.msra.mxu0 0.0
        %1050 = vmatpush.xpose.msra.mxu0 0.0
        %1051 = vmatpush.xpose.msra.mxu0 %v269
        %1052 = vmatpush.xpose.msra.mxu0 %v264
        %1053 = vmatmul.f32.gmra.mxu0 %v327
        %v1054 = vpop.f32.mrf.mxu0
        %v1055 = vadd.f32 %v325, %v1054
        %1056 = vdwg.mxu0
        %1057 = vmatpush.xpose.msra.mxu0 0.0
        %1058 = vmatpush.xpose.msra.mxu0 0.0
        %1059 = vmatpush.xpose.msra.mxu0 0.0
        %1060 = vmatpush.xpose.msra.mxu0 0.0
        %1061 = vmatpush.xpose.msra.mxu0 0.0
        %1062 = vmatpush.xpose.msra.mxu0 0.0
        %1063 = vmatpush.xpose.msra.mxu0 0.0
        %1064 = vmatpush.xpose.msra.mxu0 0.0
        %1065 = vmatpush.xpose.msra.mxu0 0.0
        %1066 = vmatpush.xpose.msra.mxu0 0.0
        %1067 = vmatpush.xpose.msra.mxu0 0.0
        %1068 = vmatpush.xpose.msra.mxu0 0.0
        %1069 = vmatpush.xpose.msra.mxu0 0.0
        %1070 = vmatpush.xpose.msra.mxu0 0.0
        %1071 = vmatpush.xpose.msra.mxu0 %v270
        %1072 = vmatpush.xpose.msra.mxu0 %v265
        %1073 = vmatmul.f32.gmra.mxu0 %v328
        %v1074 = vpop.f32.mrf.mxu0
        %v1075 = vadd.f32 %v1055, %v1074
        %1076 = vdwg.mxu0
        %1077 = vmatpush.xpose.msra.mxu0 0.0
        %1078 = vmatpush.xpose.msra.mxu0 0.0
        %1079 = vmatpush.xpose.msra.mxu0 0.0
        %1080 = vmatpush.xpose.msra.mxu0 0.0
        %1081 = vmatpush.xpose.msra.mxu0 0.0
        %1082 = vmatpush.xpose.msra.mxu0 0.0
        %1083 = vmatpush.xpose.msra.mxu0 0.0
        %1084 = vmatpush.xpose.msra.mxu0 0.0
        %1085 = vmatpush.xpose.msra.mxu0 0.0
        %1086 = vmatpush.xpose.msra.mxu0 0.0
        %1087 = vmatpush.xpose.msra.mxu0 0.0
        %1088 = vmatpush.xpose.msra.mxu0 0.0
        %1089 = vmatpush.xpose.msra.mxu0 0.0
        %1090 = vmatpush.xpose.msra.mxu0 0.0
        %1091 = vmatpush.xpose.msra.mxu0 %v271
        %1092 = vmatpush.xpose.msra.mxu0 %v266
        %1093 = vmatmul.f32.gmra.mxu0 %v329
        %v1094 = vpop.f32.mrf.mxu0
        %v1095 = vadd.f32 %v1075, %v1094
        %1096 = vdwg.mxu0
        %1097 = vmatpush.xpose.msra.mxu0 0.0
        %1098 = vmatpush.xpose.msra.mxu0 0.0
        %1099 = vmatpush.xpose.msra.mxu0 0.0
        %1100 = vmatpush.xpose.msra.mxu0 0.0
        %1101 = vmatpush.xpose.msra.mxu0 0.0
        %1102 = vmatpush.xpose.msra.mxu0 0.0
        %1103 = vmatpush.xpose.msra.mxu0 0.0
        %1104 = vmatpush.xpose.msra.mxu0 0.0
        %1105 = vmatpush.xpose.msra.mxu0 0.0
        %1106 = vmatpush.xpose.msra.mxu0 0.0
        %1107 = vmatpush.xpose.msra.mxu0 0.0
        %1108 = vmatpush.xpose.msra.mxu0 0.0
        %1109 = vmatpush.xpose.msra.mxu0 0.0
        %1110 = vmatpush.xpose.msra.mxu0 0.0
        %1111 = vmatpush.xpose.msra.mxu0 %v272
        %1112 = vmatpush.xpose.msra.mxu0 %v267
        %1113 = vmatmul.f32.gmra.mxu0 %v330
        %v1114 = vpop.f32.mrf.mxu0
        %v1115 = vadd.f32 %v1095, %v1114
        %1116 = vdwg.mxu0
        %1117 = vmatpush.xpose.msra.mxu0 0.0
        %1118 = vmatpush.xpose.msra.mxu0 0.0
        %1119 = vmatpush.xpose.msra.mxu0 0.0
        %1120 = vmatpush.xpose.msra.mxu0 0.0
        %1121 = vmatpush.xpose.msra.mxu0 0.0
        %1122 = vmatpush.xpose.msra.mxu0 0.0
        %1123 = vmatpush.xpose.msra.mxu0 0.0
        %1124 = vmatpush.xpose.msra.mxu0 0.0
        %1125 = vmatpush.xpose.msra.mxu0 0.0
        %1126 = vmatpush.xpose.msra.mxu0 0.0
        %1127 = vmatpush.xpose.msra.mxu0 0.0
        %1128 = vmatpush.xpose.msra.mxu0 0.0
        %1129 = vmatpush.xpose.msra.mxu0 0.0
        %1130 = vmatpush.xpose.msra.mxu0 0.0
        %1131 = vmatpush.xpose.msra.mxu0 %v273
        %1132 = vmatpush.xpose.msra.mxu0 %v268
        %1133 = vmatmul.f32.gmra.mxu0 %v331
        %v1134 = vpop.f32.mrf.mxu0
        %v1135 = vadd.f32 %v1115, %v1134
        %1136 = vdwg.mxu0
        %v1137 = vtanh.pop %v435
        %v1138 = vtanh.pop %v535
        %v1139 = vtanh.pop %v635
        %v1140 = vtanh.pop %v735
        %v1141 = vtanh.pop %v835
        %v1142 = vtanh.pop %v935
        %v1143 = vtanh.pop %v1035
        %v1144 = vtanh.pop %v1135
        %v1145 = vmul.f32 %v1137, 1.442695
        %v1146 = vpow.pop %v1145
        %v1147 = vmul.f32 %v1138, 1.442695
        %v1148 = vpow.pop %v1147
        %v1149 = vmul.f32 %v1139, 1.442695
        %v1150 = vpow.pop %v1149
        %v1151 = vmul.f32 %v1140, 1.442695
        %v1152 = vpow.pop %v1151
        %v1153 = vmul.f32 %v1141, 1.442695
        %v1154 = vpow.pop %v1153
        %v1155 = vmul.f32 %v1142, 1.442695
        %v1156 = vpow.pop %v1155
        %v1157 = vmul.f32 %v1143, 1.442695
        %v1158 = vpow.pop %v1157
        %v1159 = vmul.f32 %v1144, 1.442695
        %v1160 = vpow.pop %v1159
        %vm1161 = vcmask 122880
        %v1162 = vsel %vm1161, %v1146, 0.0
        %1163 = vadd.xlane.f32.xlu0 %v1162
        %v1164 = vpop.xlane.xlu0 %1163
        %v1165 = vsel %vm1161, %v1148, 0.0
        %1166 = vadd.xlane.f32.xlu0 %v1165
        %v1167 = vpop.xlane.xlu0 %1166
        %v1168 = vsel %vm1161, %v1150, 0.0
        %1169 = vadd.xlane.f32.xlu0 %v1168
        %v1170 = vpop.xlane.xlu0 %1169
        %v1171 = vsel %vm1161, %v1152, 0.0
        %1172 = vadd.xlane.f32.xlu0 %v1171
        %v1173 = vpop.xlane.xlu0 %1172
        %v1174 = vsel %vm1161, %v1154, 0.0
        %1175 = vadd.xlane.f32.xlu0 %v1174
        %v1176 = vpop.xlane.xlu0 %1175
        %v1177 = vsel %vm1161, %v1156, 0.0
        %1178 = vadd.xlane.f32.xlu0 %v1177
        %v1179 = vpop.xlane.xlu0 %1178
        %v1180 = vsel %vm1161, %v1158, 0.0
        %1181 = vadd.xlane.f32.xlu0 %v1180
        %v1182 = vpop.xlane.xlu0 %1181
        %v1183 = vsel %vm1161, %v1160, 0.0
        %1184 = vadd.xlane.f32.xlu0 %v1183
        %v1185 = vpop.xlane.xlu0 %1184
        %v1186 = vadd.f32 %v1164, 1e-07
        %v1187 = vadd.f32 %v1167, 1e-07
        %v1188 = vadd.f32 %v1170, 1e-07
        %v1189 = vadd.f32 %v1173, 1e-07
        %v1190 = vadd.f32 %v1176, 1e-07
        %v1191 = vadd.f32 %v1179, 1e-07
        %v1192 = vadd.f32 %v1182, 1e-07
        %v1193 = vadd.f32 %v1185, 1e-07
        %v1194 = vrcp.pop %v1186
        %v1195 = vrcp.pop %v1187
        %v1196 = vrcp.pop %v1188
        %v1197 = vrcp.pop %v1189
        %v1198 = vrcp.pop %v1190
        %v1199 = vrcp.pop %v1191
        %v1200 = vrcp.pop %v1192
        %v1201 = vrcp.pop %v1193
        %v1202 = vmul.f32 %v1146, %v1194
        %v1203 = vmul.f32 %v1148, %v1195
        %v1204 = vmul.f32 %v1150, %v1196
        %v1205 = vmul.f32 %v1152, %v1197
        %v1206 = vmul.f32 %v1154, %v1198
        %v1207 = vmul.f32 %v1156, %v1199
        %v1208 = vmul.f32 %v1158, %v1200
        %v1209 = vmul.f32 %v1160, %v1201
        %vm1210 = vcmask 130048
        %v1212 = vsel %vm1210, %v1202, 0
        %1214 = vmatpush.msra.mxu0 0.0
        %1215 = vmatpush.msra.mxu0 0.0
        %1216 = vmatpush.msra.mxu0 0.0
        %1217 = vmatpush.msra.mxu0 0.0
        %1218 = vmatpush.msra.mxu0 0.0
        %1219 = vmatpush.msra.mxu0 0.0
        %1220 = vmatpush.msra.mxu0 0.0
        %1221 = vmatpush.msra.mxu0 0.0
        %1222 = vmatpush.msra.mxu0 0.0
        %1223 = vmatpush.msra.mxu0 0.0
        %1224 = vmatpush.msra.mxu0 0.0
        %1225 = vmatpush.msra.mxu0 0.0
        %1226 = vmatpush.msra.mxu0 0.0
        %1227 = vmatpush.msra.mxu0 0.0
        %1228 = vmatpush.msra.mxu0 %v199
        %1229 = vmatpush.msra.mxu0 %v194
        %1230 = vmatmul.f32.gmra.mxu0 %v1212
        %v1231 = vpop.f32.mrf.mxu0
        %v1232 = vadd.f32 0.0, %v1231
        %1233 = vdwg.mxu0
        %1234 = vmatpush.msra.mxu0 0.0
        %1235 = vmatpush.msra.mxu0 0.0
        %1236 = vmatpush.msra.mxu0 0.0
        %1237 = vmatpush.msra.mxu0 0.0
        %1238 = vmatpush.msra.mxu0 0.0
        %1239 = vmatpush.msra.mxu0 0.0
        %1240 = vmatpush.msra.mxu0 0.0
        %1241 = vmatpush.msra.mxu0 0.0
        %1242 = vmatpush.msra.mxu0 0.0
        %1243 = vmatpush.msra.mxu0 0.0
        %1244 = vmatpush.msra.mxu0 0.0
        %1245 = vmatpush.msra.mxu0 0.0
        %1246 = vmatpush.msra.mxu0 0.0
        %1247 = vmatpush.msra.mxu0 0.0
        %1248 = vmatpush.msra.mxu0 %v200
        %1249 = vmatpush.msra.mxu0 %v195
        %1250 = vmatmul.f32.gmra.mxu0 %v1212
        %v1251 = vpop.f32.mrf.mxu0
        %v1252 = vadd.f32 0.0, %v1251
        %1253 = vdwg.mxu0
        %1254 = vmatpush.msra.mxu0 0.0
        %1255 = vmatpush.msra.mxu0 0.0
        %1256 = vmatpush.msra.mxu0 0.0
        %1257 = vmatpush.msra.mxu0 0.0
        %1258 = vmatpush.msra.mxu0 0.0
        %1259 = vmatpush.msra.mxu0 0.0
        %1260 = vmatpush.msra.mxu0 0.0
        %1261 = vmatpush.msra.mxu0 0.0
        %1262 = vmatpush.msra.mxu0 0.0
        %1263 = vmatpush.msra.mxu0 0.0
        %1264 = vmatpush.msra.mxu0 0.0
        %1265 = vmatpush.msra.mxu0 0.0
        %1266 = vmatpush.msra.mxu0 0.0
        %1267 = vmatpush.msra.mxu0 0.0
        %1268 = vmatpush.msra.mxu0 %v201
        %1269 = vmatpush.msra.mxu0 %v196
        %1270 = vmatmul.f32.gmra.mxu0 %v1212
        %v1271 = vpop.f32.mrf.mxu0
        %v1272 = vadd.f32 0.0, %v1271
        %1273 = vdwg.mxu0
        %1274 = vmatpush.msra.mxu0 0.0
        %1275 = vmatpush.msra.mxu0 0.0
        %1276 = vmatpush.msra.mxu0 0.0
        %1277 = vmatpush.msra.mxu0 0.0
        %1278 = vmatpush.msra.mxu0 0.0
        %1279 = vmatpush.msra.mxu0 0.0
        %1280 = vmatpush.msra.mxu0 0.0
        %1281 = vmatpush.msra.mxu0 0.0
        %1282 = vmatpush.msra.mxu0 0.0
        %1283 = vmatpush.msra.mxu0 0.0
        %1284 = vmatpush.msra.mxu0 0.0
        %1285 = vmatpush.msra.mxu0 0.0
        %1286 = vmatpush.msra.mxu0 0.0
        %1287 = vmatpush.msra.mxu0 0.0
        %1288 = vmatpush.msra.mxu0 %v202
        %1289 = vmatpush.msra.mxu0 %v197
        %1290 = vmatmul.f32.gmra.mxu0 %v1212
        %v1291 = vpop.f32.mrf.mxu0
        %v1292 = vadd.f32 0.0, %v1291
        %1293 = vdwg.mxu0
        %1294 = vmatpush.msra.mxu0 0.0
        %1295 = vmatpush.msra.mxu0 0.0
        %1296 = vmatpush.msra.mxu0 0.0
        %1297 = vmatpush.msra.mxu0 0.0
        %1298 = vmatpush.msra.mxu0 0.0
        %1299 = vmatpush.msra.mxu0 0.0
        %1300 = vmatpush.msra.mxu0 0.0
        %1301 = vmatpush.msra.mxu0 0.0
        %1302 = vmatpush.msra.mxu0 0.0
        %1303 = vmatpush.msra.mxu0 0.0
        %1304 = vmatpush.msra.mxu0 0.0
        %1305 = vmatpush.msra.mxu0 0.0
        %1306 = vmatpush.msra.mxu0 0.0
        %1307 = vmatpush.msra.mxu0 0.0
        %1308 = vmatpush.msra.mxu0 %v203
        %1309 = vmatpush.msra.mxu0 %v198
        %1310 = vmatmul.f32.gmra.mxu0 %v1212
        %v1311 = vpop.f32.mrf.mxu0
        %v1312 = vadd.f32 0.0, %v1311
        %1313 = vdwg.mxu0
        %v1315 = vsel %vm1210, %v1203, 0
        %1317 = vmatpush.msra.mxu0 0.0
        %1318 = vmatpush.msra.mxu0 0.0
        %1319 = vmatpush.msra.mxu0 0.0
        %1320 = vmatpush.msra.mxu0 0.0
        %1321 = vmatpush.msra.mxu0 0.0
        %1322 = vmatpush.msra.mxu0 0.0
        %1323 = vmatpush.msra.mxu0 0.0
        %1324 = vmatpush.msra.mxu0 0.0
        %1325 = vmatpush.msra.mxu0 0.0
        %1326 = vmatpush.msra.mxu0 0.0
        %1327 = vmatpush.msra.mxu0 0.0
        %1328 = vmatpush.msra.mxu0 0.0
        %1329 = vmatpush.msra.mxu0 0.0
        %1330 = vmatpush.msra.mxu0 0.0
        %1331 = vmatpush.msra.mxu0 %v209
        %1332 = vmatpush.msra.mxu0 %v204
        %1333 = vmatmul.f32.gmra.mxu0 %v1315
        %v1334 = vpop.f32.mrf.mxu0
        %v1335 = vadd.f32 0.0, %v1334
        %1336 = vdwg.mxu0
        %1337 = vmatpush.msra.mxu0 0.0
        %1338 = vmatpush.msra.mxu0 0.0
        %1339 = vmatpush.msra.mxu0 0.0
        %1340 = vmatpush.msra.mxu0 0.0
        %1341 = vmatpush.msra.mxu0 0.0
        %1342 = vmatpush.msra.mxu0 0.0
        %1343 = vmatpush.msra.mxu0 0.0
        %1344 = vmatpush.msra.mxu0 0.0
        %1345 = vmatpush.msra.mxu0 0.0
        %1346 = vmatpush.msra.mxu0 0.0
        %1347 = vmatpush.msra.mxu0 0.0
        %1348 = vmatpush.msra.mxu0 0.0
        %1349 = vmatpush.msra.mxu0 0.0
        %1350 = vmatpush.msra.mxu0 0.0
        %1351 = vmatpush.msra.mxu0 %v210
        %1352 = vmatpush.msra.mxu0 %v205
        %1353 = vmatmul.f32.gmra.mxu0 %v1315
        %v1354 = vpop.f32.mrf.mxu0
        %v1355 = vadd.f32 0.0, %v1354
        %1356 = vdwg.mxu0
        %1357 = vmatpush.msra.mxu0 0.0
        %1358 = vmatpush.msra.mxu0 0.0
        %1359 = vmatpush.msra.mxu0 0.0
        %1360 = vmatpush.msra.mxu0 0.0
        %1361 = vmatpush.msra.mxu0 0.0
        %1362 = vmatpush.msra.mxu0 0.0
        %1363 = vmatpush.msra.mxu0 0.0
        %1364 = vmatpush.msra.mxu0 0.0
        %1365 = vmatpush.msra.mxu0 0.0
        %1366 = vmatpush.msra.mxu0 0.0
        %1367 = vmatpush.msra.mxu0 0.0
        %1368 = vmatpush.msra.mxu0 0.0
        %1369 = vmatpush.msra.mxu0 0.0
        %1370 = vmatpush.msra.mxu0 0.0
        %1371 = vmatpush.msra.mxu0 %v211
        %1372 = vmatpush.msra.mxu0 %v206
        %1373 = vmatmul.f32.gmra.mxu0 %v1315
        %v1374 = vpop.f32.mrf.mxu0
        %v1375 = vadd.f32 0.0, %v1374
        %1376 = vdwg.mxu0
        %1377 = vmatpush.msra.mxu0 0.0
        %1378 = vmatpush.msra.mxu0 0.0
        %1379 = vmatpush.msra.mxu0 0.0
        %1380 = vmatpush.msra.mxu0 0.0
        %1381 = vmatpush.msra.mxu0 0.0
        %1382 = vmatpush.msra.mxu0 0.0
        %1383 = vmatpush.msra.mxu0 0.0
        %1384 = vmatpush.msra.mxu0 0.0
        %1385 = vmatpush.msra.mxu0 0.0
        %1386 = vmatpush.msra.mxu0 0.0
        %1387 = vmatpush.msra.mxu0 0.0
        %1388 = vmatpush.msra.mxu0 0.0
        %1389 = vmatpush.msra.mxu0 0.0
        %1390 = vmatpush.msra.mxu0 0.0
        %1391 = vmatpush.msra.mxu0 %v212
        %1392 = vmatpush.msra.mxu0 %v207
        %1393 = vmatmul.f32.gmra.mxu0 %v1315
        %v1394 = vpop.f32.mrf.mxu0
        %v1395 = vadd.f32 0.0, %v1394
        %1396 = vdwg.mxu0
        %1397 = vmatpush.msra.mxu0 0.0
        %1398 = vmatpush.msra.mxu0 0.0
        %1399 = vmatpush.msra.mxu0 0.0
        %1400 = vmatpush.msra.mxu0 0.0
        %1401 = vmatpush.msra.mxu0 0.0
        %1402 = vmatpush.msra.mxu0 0.0
        %1403 = vmatpush.msra.mxu0 0.0
        %1404 = vmatpush.msra.mxu0 0.0
        %1405 = vmatpush.msra.mxu0 0.0
        %1406 = vmatpush.msra.mxu0 0.0
        %1407 = vmatpush.msra.mxu0 0.0
        %1408 = vmatpush.msra.mxu0 0.0
        %1409 = vmatpush.msra.mxu0 0.0
        %1410 = vmatpush.msra.mxu0 0.0
        %1411 = vmatpush.msra.mxu0 %v213
        %1412 = vmatpush.msra.mxu0 %v208
        %1413 = vmatmul.f32.gmra.mxu0 %v1315
        %v1414 = vpop.f32.mrf.mxu0
        %v1415 = vadd.f32 0.0, %v1414
        %1416 = vdwg.mxu0
        %v1418 = vsel %vm1210, %v1204, 0
        %1420 = vmatpush.msra.mxu0 0.0
        %1421 = vmatpush.msra.mxu0 0.0
        %1422 = vmatpush.msra.mxu0 0.0
        %1423 = vmatpush.msra.mxu0 0.0
        %1424 = vmatpush.msra.mxu0 0.0
        %1425 = vmatpush.msra.mxu0 0.0
        %1426 = vmatpush.msra.mxu0 0.0
        %1427 = vmatpush.msra.mxu0 0.0
        %1428 = vmatpush.msra.mxu0 0.0
        %1429 = vmatpush.msra.mxu0 0.0
        %1430 = vmatpush.msra.mxu0 0.0
        %1431 = vmatpush.msra.mxu0 0.0
        %1432 = vmatpush.msra.mxu0 0.0
        %1433 = vmatpush.msra.mxu0 0.0
        %1434 = vmatpush.msra.mxu0 %v219
        %1435 = vmatpush.msra.mxu0 %v214
        %1436 = vmatmul.f32.gmra.mxu0 %v1418
        %v1437 = vpop.f32.mrf.mxu0
        %v1438 = vadd.f32 0.0, %v1437
        %1439 = vdwg.mxu0
        %1440 = vmatpush.msra.mxu0 0.0
        %1441 = vmatpush.msra.mxu0 0.0
        %1442 = vmatpush.msra.mxu0 0.0
        %1443 = vmatpush.msra.mxu0 0.0
        %1444 = vmatpush.msra.mxu0 0.0
        %1445 = vmatpush.msra.mxu0 0.0
        %1446 = vmatpush.msra.mxu0 0.0
        %1447 = vmatpush.msra.mxu0 0.0
        %1448 = vmatpush.msra.mxu0 0.0
        %1449 = vmatpush.msra.mxu0 0.0
        %1450 = vmatpush.msra.mxu0 0.0
        %1451 = vmatpush.msra.mxu0 0.0
        %1452 = vmatpush.msra.mxu0 0.0
        %1453 = vmatpush.msra.mxu0 0.0
        %1454 = vmatpush.msra.mxu0 %v220
        %1455 = vmatpush.msra.mxu0 %v215
        %1456 = vmatmul.f32.gmra.mxu0 %v1418
        %v1457 = vpop.f32.mrf.mxu0
        %v1458 = vadd.f32 0.0, %v1457
        %1459 = vdwg.mxu0
        %1460 = vmatpush.msra.mxu0 0.0
        %1461 = vmatpush.msra.mxu0 0.0
        %1462 = vmatpush.msra.mxu0 0.0
        %1463 = vmatpush.msra.mxu0 0.0
        %1464 = vmatpush.msra.mxu0 0.0
        %1465 = vmatpush.msra.mxu0 0.0
        %1466 = vmatpush.msra.mxu0 0.0
        %1467 = vmatpush.msra.mxu0 0.0
        %1468 = vmatpush.msra.mxu0 0.0
        %1469 = vmatpush.msra.mxu0 0.0
        %1470 = vmatpush.msra.mxu0 0.0
        %1471 = vmatpush.msra.mxu0 0.0
        %1472 = vmatpush.msra.mxu0 0.0
        %1473 = vmatpush.msra.mxu0 0.0
        %1474 = vmatpush.msra.mxu0 %v221
        %1475 = vmatpush.msra.mxu0 %v216
        %1476 = vmatmul.f32.gmra.mxu0 %v1418
        %v1477 = vpop.f32.mrf.mxu0
        %v1478 = vadd.f32 0.0, %v1477
        %1479 = vdwg.mxu0
        %1480 = vmatpush.msra.mxu0 0.0
        %1481 = vmatpush.msra.mxu0 0.0
        %1482 = vmatpush.msra.mxu0 0.0
        %1483 = vmatpush.msra.mxu0 0.0
        %1484 = vmatpush.msra.mxu0 0.0
        %1485 = vmatpush.msra.mxu0 0.0
        %1486 = vmatpush.msra.mxu0 0.0
        %1487 = vmatpush.msra.mxu0 0.0
        %1488 = vmatpush.msra.mxu0 0.0
        %1489 = vmatpush.msra.mxu0 0.0
        %1490 = vmatpush.msra.mxu0 0.0
        %1491 = vmatpush.msra.mxu0 0.0
        %1492 = vmatpush.msra.mxu0 0.0
        %1493 = vmatpush.msra.mxu0 0.0
        %1494 = vmatpush.msra.mxu0 %v222
        %1495 = vmatpush.msra.mxu0 %v217
        %1496 = vmatmul.f32.gmra.mxu0 %v1418
        %v1497 = vpop.f32.mrf.mxu0
        %v1498 = vadd.f32 0.0, %v1497
        %1499 = vdwg.mxu0
        %1500 = vmatpush.msra.mxu0 0.0
        %1501 = vmatpush.msra.mxu0 0.0
        %1502 = vmatpush.msra.mxu0 0.0
        %1503 = vmatpush.msra.mxu0 0.0
        %1504 = vmatpush.msra.mxu0 0.0
        %1505 = vmatpush.msra.mxu0 0.0
        %1506 = vmatpush.msra.mxu0 0.0
        %1507 = vmatpush.msra.mxu0 0.0
        %1508 = vmatpush.msra.mxu0 0.0
        %1509 = vmatpush.msra.mxu0 0.0
        %1510 = vmatpush.msra.mxu0 0.0
        %1511 = vmatpush.msra.mxu0 0.0
        %1512 = vmatpush.msra.mxu0 0.0
        %1513 = vmatpush.msra.mxu0 0.0
        %1514 = vmatpush.msra.mxu0 %v223
        %1515 = vmatpush.msra.mxu0 %v218
        %1516 = vmatmul.f32.gmra.mxu0 %v1418
        %v1517 = vpop.f32.mrf.mxu0
        %v1518 = vadd.f32 0.0, %v1517
        %1519 = vdwg.mxu0
        %v1521 = vsel %vm1210, %v1205, 0
        %1523 = vmatpush.msra.mxu0 0.0
        %1524 = vmatpush.msra.mxu0 0.0
        %1525 = vmatpush.msra.mxu0 0.0
        %1526 = vmatpush.msra.mxu0 0.0
        %1527 = vmatpush.msra.mxu0 0.0
        %1528 = vmatpush.msra.mxu0 0.0
        %1529 = vmatpush.msra.mxu0 0.0
        %1530 = vmatpush.msra.mxu0 0.0
        %1531 = vmatpush.msra.mxu0 0.0
        %1532 = vmatpush.msra.mxu0 0.0
        %1533 = vmatpush.msra.mxu0 0.0
        %1534 = vmatpush.msra.mxu0 0.0
        %1535 = vmatpush.msra.mxu0 0.0
        %1536 = vmatpush.msra.mxu0 0.0
        %1537 = vmatpush.msra.mxu0 %v229
        %1538 = vmatpush.msra.mxu0 %v224
        %1539 = vmatmul.f32.gmra.mxu0 %v1521
        %v1540 = vpop.f32.mrf.mxu0
        %v1541 = vadd.f32 0.0, %v1540
        %1542 = vdwg.mxu0
        %1543 = vmatpush.msra.mxu0 0.0
        %1544 = vmatpush.msra.mxu0 0.0
        %1545 = vmatpush.msra.mxu0 0.0
        %1546 = vmatpush.msra.mxu0 0.0
        %1547 = vmatpush.msra.mxu0 0.0
        %1548 = vmatpush.msra.mxu0 0.0
        %1549 = vmatpush.msra.mxu0 0.0
        %1550 = vmatpush.msra.mxu0 0.0
        %1551 = vmatpush.msra.mxu0 0.0
        %1552 = vmatpush.msra.mxu0 0.0
        %1553 = vmatpush.msra.mxu0 0.0
        %1554 = vmatpush.msra.mxu0 0.0
        %1555 = vmatpush.msra.mxu0 0.0
        %1556 = vmatpush.msra.mxu0 0.0
        %1557 = vmatpush.msra.mxu0 %v230
        %1558 = vmatpush.msra.mxu0 %v225
        %1559 = vmatmul.f32.gmra.mxu0 %v1521
        %v1560 = vpop.f32.mrf.mxu0
        %v1561 = vadd.f32 0.0, %v1560
        %1562 = vdwg.mxu0
        %1563 = vmatpush.msra.mxu0 0.0
        %1564 = vmatpush.msra.mxu0 0.0
        %1565 = vmatpush.msra.mxu0 0.0
        %1566 = vmatpush.msra.mxu0 0.0
        %1567 = vmatpush.msra.mxu0 0.0
        %1568 = vmatpush.msra.mxu0 0.0
        %1569 = vmatpush.msra.mxu0 0.0
        %1570 = vmatpush.msra.mxu0 0.0
        %1571 = vmatpush.msra.mxu0 0.0
        %1572 = vmatpush.msra.mxu0 0.0
        %1573 = vmatpush.msra.mxu0 0.0
        %1574 = vmatpush.msra.mxu0 0.0
        %1575 = vmatpush.msra.mxu0 0.0
        %1576 = vmatpush.msra.mxu0 0.0
        %1577 = vmatpush.msra.mxu0 %v231
        %1578 = vmatpush.msra.mxu0 %v226
        %1579 = vmatmul.f32.gmra.mxu0 %v1521
        %v1580 = vpop.f32.mrf.mxu0
        %v1581 = vadd.f32 0.0, %v1580
        %1582 = vdwg.mxu0
        %1583 = vmatpush.msra.mxu0 0.0
        %1584 = vmatpush.msra.mxu0 0.0
        %1585 = vmatpush.msra.mxu0 0.0
        %1586 = vmatpush.msra.mxu0 0.0
        %1587 = vmatpush.msra.mxu0 0.0
        %1588 = vmatpush.msra.mxu0 0.0
        %1589 = vmatpush.msra.mxu0 0.0
        %1590 = vmatpush.msra.mxu0 0.0
        %1591 = vmatpush.msra.mxu0 0.0
        %1592 = vmatpush.msra.mxu0 0.0
        %1593 = vmatpush.msra.mxu0 0.0
        %1594 = vmatpush.msra.mxu0 0.0
        %1595 = vmatpush.msra.mxu0 0.0
        %1596 = vmatpush.msra.mxu0 0.0
        %1597 = vmatpush.msra.mxu0 %v232
        %1598 = vmatpush.msra.mxu0 %v227
        %1599 = vmatmul.f32.gmra.mxu0 %v1521
        %v1600 = vpop.f32.mrf.mxu0
        %v1601 = vadd.f32 0.0, %v1600
        %1602 = vdwg.mxu0
        %1603 = vmatpush.msra.mxu0 0.0
        %1604 = vmatpush.msra.mxu0 0.0
        %1605 = vmatpush.msra.mxu0 0.0
        %1606 = vmatpush.msra.mxu0 0.0
        %1607 = vmatpush.msra.mxu0 0.0
        %1608 = vmatpush.msra.mxu0 0.0
        %1609 = vmatpush.msra.mxu0 0.0
        %1610 = vmatpush.msra.mxu0 0.0
        %1611 = vmatpush.msra.mxu0 0.0
        %1612 = vmatpush.msra.mxu0 0.0
        %1613 = vmatpush.msra.mxu0 0.0
        %1614 = vmatpush.msra.mxu0 0.0
        %1615 = vmatpush.msra.mxu0 0.0
        %1616 = vmatpush.msra.mxu0 0.0
        %1617 = vmatpush.msra.mxu0 %v233
        %1618 = vmatpush.msra.mxu0 %v228
        %1619 = vmatmul.f32.gmra.mxu0 %v1521
        %v1620 = vpop.f32.mrf.mxu0
        %v1621 = vadd.f32 0.0, %v1620
        %1622 = vdwg.mxu0
        %v1624 = vsel %vm1210, %v1206, 0
        %1626 = vmatpush.msra.mxu0 0.0
        %1627 = vmatpush.msra.mxu0 0.0
        %1628 = vmatpush.msra.mxu0 0.0
        %1629 = vmatpush.msra.mxu0 0.0
        %1630 = vmatpush.msra.mxu0 0.0
        %1631 = vmatpush.msra.mxu0 0.0
        %1632 = vmatpush.msra.mxu0 0.0
        %1633 = vmatpush.msra.mxu0 0.0
        %1634 = vmatpush.msra.mxu0 0.0
        %1635 = vmatpush.msra.mxu0 0.0
        %1636 = vmatpush.msra.mxu0 0.0
        %1637 = vmatpush.msra.mxu0 0.0
        %1638 = vmatpush.msra.mxu0 0.0
        %1639 = vmatpush.msra.mxu0 0.0
        %1640 = vmatpush.msra.mxu0 %v239
        %1641 = vmatpush.msra.mxu0 %v234
        %1642 = vmatmul.f32.gmra.mxu0 %v1624
        %v1643 = vpop.f32.mrf.mxu0
        %v1644 = vadd.f32 0.0, %v1643
        %1645 = vdwg.mxu0
        %1646 = vmatpush.msra.mxu0 0.0
        %1647 = vmatpush.msra.mxu0 0.0
        %1648 = vmatpush.msra.mxu0 0.0
        %1649 = vmatpush.msra.mxu0 0.0
        %1650 = vmatpush.msra.mxu0 0.0
        %1651 = vmatpush.msra.mxu0 0.0
        %1652 = vmatpush.msra.mxu0 0.0
        %1653 = vmatpush.msra.mxu0 0.0
        %1654 = vmatpush.msra.mxu0 0.0
        %1655 = vmatpush.msra.mxu0 0.0
        %1656 = vmatpush.msra.mxu0 0.0
        %1657 = vmatpush.msra.mxu0 0.0
        %1658 = vmatpush.msra.mxu0 0.0
        %1659 = vmatpush.msra.mxu0 0.0
        %1660 = vmatpush.msra.mxu0 %v240
        %1661 = vmatpush.msra.mxu0 %v235
        %1662 = vmatmul.f32.gmra.mxu0 %v1624
        %v1663 = vpop.f32.mrf.mxu0
        %v1664 = vadd.f32 0.0, %v1663
        %1665 = vdwg.mxu0
        %1666 = vmatpush.msra.mxu0 0.0
        %1667 = vmatpush.msra.mxu0 0.0
        %1668 = vmatpush.msra.mxu0 0.0
        %1669 = vmatpush.msra.mxu0 0.0
        %1670 = vmatpush.msra.mxu0 0.0
        %1671 = vmatpush.msra.mxu0 0.0
        %1672 = vmatpush.msra.mxu0 0.0
        %1673 = vmatpush.msra.mxu0 0.0
        %1674 = vmatpush.msra.mxu0 0.0
        %1675 = vmatpush.msra.mxu0 0.0
        %1676 = vmatpush.msra.mxu0 0.0
        %1677 = vmatpush.msra.mxu0 0.0
        %1678 = vmatpush.msra.mxu0 0.0
        %1679 = vmatpush.msra.mxu0 0.0
        %1680 = vmatpush.msra.mxu0 %v241
        %1681 = vmatpush.msra.mxu0 %v236
        %1682 = vmatmul.f32.gmra.mxu0 %v1624
        %v1683 = vpop.f32.mrf.mxu0
        %v1684 = vadd.f32 0.0, %v1683
        %1685 = vdwg.mxu0
        %1686 = vmatpush.msra.mxu0 0.0
        %1687 = vmatpush.msra.mxu0 0.0
        %1688 = vmatpush.msra.mxu0 0.0
        %1689 = vmatpush.msra.mxu0 0.0
        %1690 = vmatpush.msra.mxu0 0.0
        %1691 = vmatpush.msra.mxu0 0.0
        %1692 = vmatpush.msra.mxu0 0.0
        %1693 = vmatpush.msra.mxu0 0.0
        %1694 = vmatpush.msra.mxu0 0.0
        %1695 = vmatpush.msra.mxu0 0.0
        %1696 = vmatpush.msra.mxu0 0.0
        %1697 = vmatpush.msra.mxu0 0.0
        %1698 = vmatpush.msra.mxu0 0.0
        %1699 = vmatpush.msra.mxu0 0.0
        %1700 = vmatpush.msra.mxu0 %v242
        %1701 = vmatpush.msra.mxu0 %v237
        %1702 = vmatmul.f32.gmra.mxu0 %v1624
        %v1703 = vpop.f32.mrf.mxu0
        %v1704 = vadd.f32 0.0, %v1703
        %1705 = vdwg.mxu0
        %1706 = vmatpush.msra.mxu0 0.0
        %1707 = vmatpush.msra.mxu0 0.0
        %1708 = vmatpush.msra.mxu0 0.0
        %1709 = vmatpush.msra.mxu0 0.0
        %1710 = vmatpush.msra.mxu0 0.0
        %1711 = vmatpush.msra.mxu0 0.0
        %1712 = vmatpush.msra.mxu0 0.0
        %1713 = vmatpush.msra.mxu0 0.0
        %1714 = vmatpush.msra.mxu0 0.0
        %1715 = vmatpush.msra.mxu0 0.0
        %1716 = vmatpush.msra.mxu0 0.0
        %1717 = vmatpush.msra.mxu0 0.0
        %1718 = vmatpush.msra.mxu0 0.0
        %1719 = vmatpush.msra.mxu0 0.0
        %1720 = vmatpush.msra.mxu0 %v243
        %1721 = vmatpush.msra.mxu0 %v238
        %1722 = vmatmul.f32.gmra.mxu0 %v1624
        %v1723 = vpop.f32.mrf.mxu0
        %v1724 = vadd.f32 0.0, %v1723
        %1725 = vdwg.mxu0
        %v1727 = vsel %vm1210, %v1207, 0
        %1729 = vmatpush.msra.mxu0 0.0
        %1730 = vmatpush.msra.mxu0 0.0
        %1731 = vmatpush.msra.mxu0 0.0
        %1732 = vmatpush.msra.mxu0 0.0
        %1733 = vmatpush.msra.mxu0 0.0
        %1734 = vmatpush.msra.mxu0 0.0
        %1735 = vmatpush.msra.mxu0 0.0
        %1736 = vmatpush.msra.mxu0 0.0
        %1737 = vmatpush.msra.mxu0 0.0
        %1738 = vmatpush.msra.mxu0 0.0
        %1739 = vmatpush.msra.mxu0 0.0
        %1740 = vmatpush.msra.mxu0 0.0
        %1741 = vmatpush.msra.mxu0 0.0
        %1742 = vmatpush.msra.mxu0 0.0
        %1743 = vmatpush.msra.mxu0 %v249
        %1744 = vmatpush.msra.mxu0 %v244
        %1745 = vmatmul.f32.gmra.mxu0 %v1727
        %v1746 = vpop.f32.mrf.mxu0
        %v1747 = vadd.f32 0.0, %v1746
        %1748 = vdwg.mxu0
        %1749 = vmatpush.msra.mxu0 0.0
        %1750 = vmatpush.msra.mxu0 0.0
        %1751 = vmatpush.msra.mxu0 0.0
        %1752 = vmatpush.msra.mxu0 0.0
        %1753 = vmatpush.msra.mxu0 0.0
        %1754 = vmatpush.msra.mxu0 0.0
        %1755 = vmatpush.msra.mxu0 0.0
        %1756 = vmatpush.msra.mxu0 0.0
        %1757 = vmatpush.msra.mxu0 0.0
        %1758 = vmatpush.msra.mxu0 0.0
        %1759 = vmatpush.msra.mxu0 0.0
        %1760 = vmatpush.msra.mxu0 0.0
        %1761 = vmatpush.msra.mxu0 0.0
        %1762 = vmatpush.msra.mxu0 0.0
        %1763 = vmatpush.msra.mxu0 %v250
        %1764 = vmatpush.msra.mxu0 %v245
        %1765 = vmatmul.f32.gmra.mxu0 %v1727
        %v1766 = vpop.f32.mrf.mxu0
        %v1767 = vadd.f32 0.0, %v1766
        %1768 = vdwg.mxu0
        %1769 = vmatpush.msra.mxu0 0.0
        %1770 = vmatpush.msra.mxu0 0.0
        %1771 = vmatpush.msra.mxu0 0.0
        %1772 = vmatpush.msra.mxu0 0.0
        %1773 = vmatpush.msra.mxu0 0.0
        %1774 = vmatpush.msra.mxu0 0.0
        %1775 = vmatpush.msra.mxu0 0.0
        %1776 = vmatpush.msra.mxu0 0.0
        %1777 = vmatpush.msra.mxu0 0.0
        %1778 = vmatpush.msra.mxu0 0.0
        %1779 = vmatpush.msra.mxu0 0.0
        %1780 = vmatpush.msra.mxu0 0.0
        %1781 = vmatpush.msra.mxu0 0.0
        %1782 = vmatpush.msra.mxu0 0.0
        %1783 = vmatpush.msra.mxu0 %v251
        %1784 = vmatpush.msra.mxu0 %v246
        %1785 = vmatmul.f32.gmra.mxu0 %v1727
        %v1786 = vpop.f32.mrf.mxu0
        %v1787 = vadd.f32 0.0, %v1786
        %1788 = vdwg.mxu0
        %1789 = vmatpush.msra.mxu0 0.0
        %1790 = vmatpush.msra.mxu0 0.0
        %1791 = vmatpush.msra.mxu0 0.0
        %1792 = vmatpush.msra.mxu0 0.0
        %1793 = vmatpush.msra.mxu0 0.0
        %1794 = vmatpush.msra.mxu0 0.0
        %1795 = vmatpush.msra.mxu0 0.0
        %1796 = vmatpush.msra.mxu0 0.0
        %1797 = vmatpush.msra.mxu0 0.0
        %1798 = vmatpush.msra.mxu0 0.0
        %1799 = vmatpush.msra.mxu0 0.0
        %1800 = vmatpush.msra.mxu0 0.0
        %1801 = vmatpush.msra.mxu0 0.0
        %1802 = vmatpush.msra.mxu0 0.0
        %1803 = vmatpush.msra.mxu0 %v252
        %1804 = vmatpush.msra.mxu0 %v247
        %1805 = vmatmul.f32.gmra.mxu0 %v1727
        %v1806 = vpop.f32.mrf.mxu0
        %v1807 = vadd.f32 0.0, %v1806
        %1808 = vdwg.mxu0
        %1809 = vmatpush.msra.mxu0 0.0
        %1810 = vmatpush.msra.mxu0 0.0
        %1811 = vmatpush.msra.mxu0 0.0
        %1812 = vmatpush.msra.mxu0 0.0
        %1813 = vmatpush.msra.mxu0 0.0
        %1814 = vmatpush.msra.mxu0 0.0
        %1815 = vmatpush.msra.mxu0 0.0
        %1816 = vmatpush.msra.mxu0 0.0
        %1817 = vmatpush.msra.mxu0 0.0
        %1818 = vmatpush.msra.mxu0 0.0
        %1819 = vmatpush.msra.mxu0 0.0
        %1820 = vmatpush.msra.mxu0 0.0
        %1821 = vmatpush.msra.mxu0 0.0
        %1822 = vmatpush.msra.mxu0 0.0
        %1823 = vmatpush.msra.mxu0 %v253
        %1824 = vmatpush.msra.mxu0 %v248
        %1825 = vmatmul.f32.gmra.mxu0 %v1727
        %v1826 = vpop.f32.mrf.mxu0
        %v1827 = vadd.f32 0.0, %v1826
        %1828 = vdwg.mxu0
        %v1830 = vsel %vm1210, %v1208, 0
        %1832 = vmatpush.msra.mxu0 0.0
        %1833 = vmatpush.msra.mxu0 0.0
        %1834 = vmatpush.msra.mxu0 0.0
        %1835 = vmatpush.msra.mxu0 0.0
        %1836 = vmatpush.msra.mxu0 0.0
        %1837 = vmatpush.msra.mxu0 0.0
        %1838 = vmatpush.msra.mxu0 0.0
        %1839 = vmatpush.msra.mxu0 0.0
        %1840 = vmatpush.msra.mxu0 0.0
        %1841 = vmatpush.msra.mxu0 0.0
        %1842 = vmatpush.msra.mxu0 0.0
        %1843 = vmatpush.msra.mxu0 0.0
        %1844 = vmatpush.msra.mxu0 0.0
        %1845 = vmatpush.msra.mxu0 0.0
        %1846 = vmatpush.msra.mxu0 %v259
        %1847 = vmatpush.msra.mxu0 %v254
        %1848 = vmatmul.f32.gmra.mxu0 %v1830
        %v1849 = vpop.f32.mrf.mxu0
        %v1850 = vadd.f32 0.0, %v1849
        %1851 = vdwg.mxu0
        %1852 = vmatpush.msra.mxu0 0.0
        %1853 = vmatpush.msra.mxu0 0.0
        %1854 = vmatpush.msra.mxu0 0.0
        %1855 = vmatpush.msra.mxu0 0.0
        %1856 = vmatpush.msra.mxu0 0.0
        %1857 = vmatpush.msra.mxu0 0.0
        %1858 = vmatpush.msra.mxu0 0.0
        %1859 = vmatpush.msra.mxu0 0.0
        %1860 = vmatpush.msra.mxu0 0.0
        %1861 = vmatpush.msra.mxu0 0.0
        %1862 = vmatpush.msra.mxu0 0.0
        %1863 = vmatpush.msra.mxu0 0.0
        %1864 = vmatpush.msra.mxu0 0.0
        %1865 = vmatpush.msra.mxu0 0.0
        %1866 = vmatpush.msra.mxu0 %v260
        %1867 = vmatpush.msra.mxu0 %v255
        %1868 = vmatmul.f32.gmra.mxu0 %v1830
        %v1869 = vpop.f32.mrf.mxu0
        %v1870 = vadd.f32 0.0, %v1869
        %1871 = vdwg.mxu0
        %1872 = vmatpush.msra.mxu0 0.0
        %1873 = vmatpush.msra.mxu0 0.0
        %1874 = vmatpush.msra.mxu0 0.0
        %1875 = vmatpush.msra.mxu0 0.0
        %1876 = vmatpush.msra.mxu0 0.0
        %1877 = vmatpush.msra.mxu0 0.0
        %1878 = vmatpush.msra.mxu0 0.0
        %1879 = vmatpush.msra.mxu0 0.0
        %1880 = vmatpush.msra.mxu0 0.0
        %1881 = vmatpush.msra.mxu0 0.0
        %1882 = vmatpush.msra.mxu0 0.0
        %1883 = vmatpush.msra.mxu0 0.0
        %1884 = vmatpush.msra.mxu0 0.0
        %1885 = vmatpush.msra.mxu0 0.0
        %1886 = vmatpush.msra.mxu0 %v261
        %1887 = vmatpush.msra.mxu0 %v256
        %1888 = vmatmul.f32.gmra.mxu0 %v1830
        %v1889 = vpop.f32.mrf.mxu0
        %v1890 = vadd.f32 0.0, %v1889
        %1891 = vdwg.mxu0
        %1892 = vmatpush.msra.mxu0 0.0
        %1893 = vmatpush.msra.mxu0 0.0
        %1894 = vmatpush.msra.mxu0 0.0
        %1895 = vmatpush.msra.mxu0 0.0
        %1896 = vmatpush.msra.mxu0 0.0
        %1897 = vmatpush.msra.mxu0 0.0
        %1898 = vmatpush.msra.mxu0 0.0
        %1899 = vmatpush.msra.mxu0 0.0
        %1900 = vmatpush.msra.mxu0 0.0
        %1901 = vmatpush.msra.mxu0 0.0
        %1902 = vmatpush.msra.mxu0 0.0
        %1903 = vmatpush.msra.mxu0 0.0
        %1904 = vmatpush.msra.mxu0 0.0
        %1905 = vmatpush.msra.mxu0 0.0
        %1906 = vmatpush.msra.mxu0 %v262
        %1907 = vmatpush.msra.mxu0 %v257
        %1908 = vmatmul.f32.gmra.mxu0 %v1830
        %v1909 = vpop.f32.mrf.mxu0
        %v1910 = vadd.f32 0.0, %v1909
        %1911 = vdwg.mxu0
        %1912 = vmatpush.msra.mxu0 0.0
        %1913 = vmatpush.msra.mxu0 0.0
        %1914 = vmatpush.msra.mxu0 0.0
        %1915 = vmatpush.msra.mxu0 0.0
        %1916 = vmatpush.msra.mxu0 0.0
        %1917 = vmatpush.msra.mxu0 0.0
        %1918 = vmatpush.msra.mxu0 0.0
        %1919 = vmatpush.msra.mxu0 0.0
        %1920 = vmatpush.msra.mxu0 0.0
        %1921 = vmatpush.msra.mxu0 0.0
        %1922 = vmatpush.msra.mxu0 0.0
        %1923 = vmatpush.msra.mxu0 0.0
        %1924 = vmatpush.msra.mxu0 0.0
        %1925 = vmatpush.msra.mxu0 0.0
        %1926 = vmatpush.msra.mxu0 %v263
        %1927 = vmatpush.msra.mxu0 %v258
        %1928 = vmatmul.f32.gmra.mxu0 %v1830
        %v1929 = vpop.f32.mrf.mxu0
        %v1930 = vadd.f32 0.0, %v1929
        %1931 = vdwg.mxu0
        %v1933 = vsel %vm1210, %v1209, 0
        %1935 = vmatpush.msra.mxu0 0.0
        %1936 = vmatpush.msra.mxu0 0.0
        %1937 = vmatpush.msra.mxu0 0.0
        %1938 = vmatpush.msra.mxu0 0.0
        %1939 = vmatpush.msra.mxu0 0.0
        %1940 = vmatpush.msra.mxu0 0.0
        %1941 = vmatpush.msra.mxu0 0.0
        %1942 = vmatpush.msra.mxu0 0.0
        %1943 = vmatpush.msra.mxu0 0.0
        %1944 = vmatpush.msra.mxu0 0.0
        %1945 = vmatpush.msra.mxu0 0.0
        %1946 = vmatpush.msra.mxu0 0.0
        %1947 = vmatpush.msra.mxu0 0.0
        %1948 = vmatpush.msra.mxu0 0.0
        %1949 = vmatpush.msra.mxu0 %v269
        %1950 = vmatpush.msra.mxu0 %v264
        %1951 = vmatmul.f32.gmra.mxu0 %v1933
        %v1952 = vpop.f32.mrf.mxu0
        %v1953 = vadd.f32 0.0, %v1952
        %1954 = vdwg.mxu0
        %1955 = vmatpush.msra.mxu0 0.0
        %1956 = vmatpush.msra.mxu0 0.0
        %1957 = vmatpush.msra.mxu0 0.0
        %1958 = vmatpush.msra.mxu0 0.0
        %1959 = vmatpush.msra.mxu0 0.0
        %1960 = vmatpush.msra.mxu0 0.0
        %1961 = vmatpush.msra.mxu0 0.0
        %1962 = vmatpush.msra.mxu0 0.0
        %1963 = vmatpush.msra.mxu0 0.0
        %1964 = vmatpush.msra.mxu0 0.0
        %1965 = vmatpush.msra.mxu0 0.0
        %1966 = vmatpush.msra.mxu0 0.0
        %1967 = vmatpush.msra.mxu0 0.0
        %1968 = vmatpush.msra.mxu0 0.0
        %1969 = vmatpush.msra.mxu0 %v270
        %1970 = vmatpush.msra.mxu0 %v265
        %1971 = vmatmul.f32.gmra.mxu0 %v1933
        %v1972 = vpop.f32.mrf.mxu0
        %v1973 = vadd.f32 0.0, %v1972
        %1974 = vdwg.mxu0
        %1975 = vmatpush.msra.mxu0 0.0
        %1976 = vmatpush.msra.mxu0 0.0
        %1977 = vmatpush.msra.mxu0 0.0
        %1978 = vmatpush.msra.mxu0 0.0
        %1979 = vmatpush.msra.mxu0 0.0
        %1980 = vmatpush.msra.mxu0 0.0
        %1981 = vmatpush.msra.mxu0 0.0
        %1982 = vmatpush.msra.mxu0 0.0
        %1983 = vmatpush.msra.mxu0 0.0
        %1984 = vmatpush.msra.mxu0 0.0
        %1985 = vmatpush.msra.mxu0 0.0
        %1986 = vmatpush.msra.mxu0 0.0
        %1987 = vmatpush.msra.mxu0 0.0
        %1988 = vmatpush.msra.mxu0 0.0
        %1989 = vmatpush.msra.mxu0 %v271
        %1990 = vmatpush.msra.mxu0 %v266
        %1991 = vmatmul.f32.gmra.mxu0 %v1933
        %v1992 = vpop.f32.mrf.mxu0
        %v1993 = vadd.f32 0.0, %v1992
        %1994 = vdwg.mxu0
        %1995 = vmatpush.msra.mxu0 0.0
        %1996 = vmatpush.msra.mxu0 0.0
        %1997 = vmatpush.msra.mxu0 0.0
        %1998 = vmatpush.msra.mxu0 0.0
        %1999 = vmatpush.msra.mxu0 0.0
        %2000 = vmatpush.msra.mxu0 0.0
        %2001 = vmatpush.msra.mxu0 0.0
        %2002 = vmatpush.msra.mxu0 0.0
        %2003 = vmatpush.msra.mxu0 0.0
        %2004 = vmatpush.msra.mxu0 0.0
        %2005 = vmatpush.msra.mxu0 0.0
        %2006 = vmatpush.msra.mxu0 0.0
        %2007 = vmatpush.msra.mxu0 0.0
        %2008 = vmatpush.msra.mxu0 0.0
        %2009 = vmatpush.msra.mxu0 %v272
        %2010 = vmatpush.msra.mxu0 %v267
        %2011 = vmatmul.f32.gmra.mxu0 %v1933
        %v2012 = vpop.f32.mrf.mxu0
        %v2013 = vadd.f32 0.0, %v2012
        %2014 = vdwg.mxu0
        %2015 = vmatpush.msra.mxu0 0.0
        %2016 = vmatpush.msra.mxu0 0.0
        %2017 = vmatpush.msra.mxu0 0.0
        %2018 = vmatpush.msra.mxu0 0.0
        %2019 = vmatpush.msra.mxu0 0.0
        %2020 = vmatpush.msra.mxu0 0.0
        %2021 = vmatpush.msra.mxu0 0.0
        %2022 = vmatpush.msra.mxu0 0.0
        %2023 = vmatpush.msra.mxu0 0.0
        %2024 = vmatpush.msra.mxu0 0.0
        %2025 = vmatpush.msra.mxu0 0.0
        %2026 = vmatpush.msra.mxu0 0.0
        %2027 = vmatpush.msra.mxu0 0.0
        %2028 = vmatpush.msra.mxu0 0.0
        %2029 = vmatpush.msra.mxu0 %v273
        %2030 = vmatpush.msra.mxu0 %v268
        %2031 = vmatmul.f32.gmra.mxu0 %v1933
        %v2032 = vpop.f32.mrf.mxu0
        %v2033 = vadd.f32 0.0, %v2032
        %2034 = vdwg.mxu0
        %v2075 = vrot.slane %v1252, 7
        %v2076 = vrot.slane %v1272, 6
        %v2077 = vrot.slane %v1292, 5
        %v2078 = vrot.slane %v1312, 4
        %v2079 = vrot.slane %v1355, 7
        %v2080 = vrot.slane %v1375, 6
        %v2081 = vrot.slane %v1395, 5
        %v2082 = vrot.slane %v1415, 4
        %v2083 = vrot.slane %v1458, 7
        %v2084 = vrot.slane %v1478, 6
        %v2085 = vrot.slane %v1498, 5
        %v2086 = vrot.slane %v1518, 4
        %v2087 = vrot.slane %v1561, 7
        %v2088 = vrot.slane %v1581, 6
        %v2089 = vrot.slane %v1601, 5
        %v2090 = vrot.slane %v1621, 4
        %v2091 = vrot.slane %v1664, 7
        %v2092 = vrot.slane %v1684, 6
        %v2093 = vrot.slane %v1704, 5
        %v2094 = vrot.slane %v1724, 4
        %v2095 = vrot.slane %v1767, 7
        %v2096 = vrot.slane %v1787, 6
        %v2097 = vrot.slane %v1807, 5
        %v2098 = vrot.slane %v1827, 4
        %v2099 = vrot.slane %v1870, 7
        %v2100 = vrot.slane %v1890, 6
        %v2101 = vrot.slane %v1910, 5
        %v2102 = vrot.slane %v1930, 4
        %v2103 = vrot.slane %v1973, 7
        %v2104 = vrot.slane %v1993, 6
        %v2105 = vrot.slane %v2013, 5
        %v2106 = vrot.slane %v2033, 4
        %vm2107 = vcmask 1040384
        %v2108 = vsel %vm2107, %v1232, %v2075
        %vm2109 = vcmask 1041408
        %v2110 = vsel %vm2109, %v2108, %v2076
        %vm2111 = vcmask 1043459
        %v2112 = vsel %vm2111, %v2077, %v2078
        %vm2113 = vcmask 1042432
        %v2114 = vsel %vm2113, %v2110, %v2112
        %v2115 = vsel %vm2107, %v1335, %v2079
        %v2116 = vsel %vm2109, %v2115, %v2080
        %v2117 = vsel %vm2111, %v2081, %v2082
        %v2118 = vsel %vm2113, %v2116, %v2117
        %v2119 = vsel %vm2107, %v1438, %v2083
        %v2120 = vsel %vm2109, %v2119, %v2084
        %v2121 = vsel %vm2111, %v2085, %v2086
        %v2122 = vsel %vm2113, %v2120, %v2121
        %v2123 = vsel %vm2107, %v1541, %v2087
        %v2124 = vsel %vm2109, %v2123, %v2088
        %v2125 = vsel %vm2111, %v2089, %v2090
        %v2126 = vsel %vm2113, %v2124, %v2125
        %v2127 = vsel %vm2107, %v1644, %v2091
        %v2128 = vsel %vm2109, %v2127, %v2092
        %v2129 = vsel %vm2111, %v2093, %v2094
        %v2130 = vsel %vm2113, %v2128, %v2129
        %v2131 = vsel %vm2107, %v1747, %v2095
        %v2132 = vsel %vm2109, %v2131, %v2096
        %v2133 = vsel %vm2111, %v2097, %v2098
        %v2134 = vsel %vm2113, %v2132, %v2133
        %v2135 = vsel %vm2107, %v1850, %v2099
        %v2136 = vsel %vm2109, %v2135, %v2100
        %v2137 = vsel %vm2111, %v2101, %v2102
        %v2138 = vsel %vm2113, %v2136, %v2137
        %v2139 = vsel %vm2107, %v1953, %v2103
        %v2140 = vsel %vm2109, %v2139, %v2104
        %v2141 = vsel %vm2111, %v2105, %v2106
        %v2142 = vsel %vm2113, %v2140, %v2141
        %v2151 = vlaneseq
        %vm2152 = vcmp.ge.s32.totalorder %v2151, 0
        %vm2153 = vcmp.lt.s32.totalorder %v2151, 640
        %vm2154 = vmand %vm2152, %vm2153
        %2155 = vst.msk [vmem:[%s191] sm:$0x1f] %vm2154, %v2114
        %2156 = vst.msk [vmem:[%s191 + $0x5] sm:$0x1f] %vm2154, %v2118
        %2157 = vst.msk [vmem:[%s191 + $0xa] sm:$0x1f] %vm2154, %v2122
        %2158 = vst.msk [vmem:[%s191 + $0xf] sm:$0x1f] %vm2154, %v2126
        %2159 = vst.msk [vmem:[%s191 + $0x14] sm:$0x1f] %vm2154, %v2130
        %2160 = vst.msk [vmem:[%s191 + $0x19] sm:$0x1f] %vm2154, %v2134
        %2161 = vst.msk [vmem:[%s191 + $0x1e] sm:$0x1f] %vm2154, %v2138
        %2162 = vst.msk [vmem:[%s191 + $0x23] sm:$0x1f] %vm2154, %v2142
        %s2163 = sand.u32 %s96, 1
        %s2164 = scalar_lea.sflag [#allocation4], %s2163
        %s2165 = sand.u32 %s96, 1
        %s2166 = smul.addr %s2165, 40
        %s2167 = scalar_lea.vmem [#allocation5], %s2166
        // Predicated region
        $region37: #{tpu_custom_call.1} parent=31 // pred_check
          %p2168 = pneg %p106
        $region38: #{tpu_custom_call.1} parent=31 // pred_check_branch
          %2170 = sbr.rel (%p2168) target = $region40
        $region39: #{tpu_custom_call.1} parent=31 // pred_region
          %s2171 = smul.u32 8, %s20
          %2173 = vsyncadd %s2164, 0
          %s2174 = smul.addr %s2171, 5
          %s2175 = scalar_lea.hbm %s3, %s2174
          %s2176 = sshll.u32 %s2167, 4
          %s2177 = int_to_ptr.vmem [resolvable:$true] %s2176
          %s2178 = sshll.u32 %s2175, 4
          %s2179 = int_to_ptr.hbm [resolvable:$true] %s2178
          %2184 = dma.vmem_to_hbm [thread:$0]  %s2177, 640, %s2179, %s2164, 80, 80, 5
        $region40: #{tpu_custom_call.1} parent=31 // pred_fallthru
          _
      $region32: #{tpu_custom_call.1} parent=5 // pred_fallthru
        _
      %p2185 = scmp.le.s32.totalorder 2, %s15
      // Predicated region
      $region41: #{tpu_custom_call.1} parent=5 // pred_check
        %p2186 = pneg %p2185
      $region42: #{tpu_custom_call.1} parent=5 // pred_check_branch
        %2188 = sbr.rel (%p2186) target = $region44
      $region43: #{tpu_custom_call.1} parent=5 // pred_region
        %s2189 = ssub.s32 %s15, 2
        // Predicated region
        $region45: #{tpu_custom_call.1} parent=43 // pred_check
          %p2190 = pneg %p112
        $region46: #{tpu_custom_call.1} parent=43 // pred_check_branch
          %2192 = sbr.rel (%p2190) target = $region48
        $region47: #{tpu_custom_call.1} parent=43 // pred_region
          %s2193 = sand.u32 %s97, 1
          %s2194 = scalar_lea.sflag [#allocation4], %s2193
          %s2195 = sand.u32 %s97, 1
          %s2196 = smul.addr %s2195, 40
          %s2197 = scalar_lea.vmem [#allocation5], %s2196
          %2199 = dma.done %s2194, 640
        $region48: #{tpu_custom_call.1} parent=43 // pred_fallthru
          _
      $region44: #{tpu_custom_call.1} parent=5 // pred_fallthru
        _
    $region6: #{tpu_custom_call.1} parent=1 // loop_footer
      %s19 = sadd.s32 1, %s15
    $region7: #{tpu_custom_call.1} parent=1 // loop_footer_branch
      %14 = sbr.rel target = $region3
    $region8: #{tpu_custom_call.1} parent=1 // loop_exit
      _
    %2200 = vsyncpa [#allocation3], 1
    %s2201 = scalar_lea.sflag [#allocation3], 1
    %2202 = vsyncpa %s2201, 1
    %2203 = vsyncpa [#allocation4], 1
    %s2204 = scalar_lea.sflag [#allocation4], 1
    %2205 = vsyncpa %s2204, 1

</llo_original>
